<compile_context>
chip_gen: v6e
topology: v6e:2x2x1
jax: 0.10.0
libtpu: 0.0.40
codegen_flags: <defaults>
</compile_context>

<pallas_src>
import jax
import jax.numpy as jnp
from jax.experimental import pallas as pl
from jax.experimental.pallas import tpu as pltpu

NUM_HEADS = 4
LN_EPS = 1e-5


def _layernorm(x, gamma, beta):
    # f32 statistics; rsqrt goes to the EUP.
    mu = jnp.mean(x, axis=-1, keepdims=True)
    var = jnp.mean((x - mu) ** 2, axis=-1, keepdims=True)
    return (x - mu) * jax.lax.rsqrt(var + LN_EPS) * gamma + beta


def fused_student_qa_kernel(
        x_ref, mask_ref,
        wq_ref, bq_ref, wk_ref, bk_ref, wv_ref, bv_ref,
        wo_ref, bo_ref, ln1g_ref, ln1b_ref,
        w1_ref, b1_ref, w2_ref, b2_ref, ln2g_ref, ln2b_ref,
        wqa_ref, bqa_ref,
        out_ref, acc_ref):
    # Grid: (batch, layer). Activation lives in acc_ref (VMEM) across layers.
    l = pl.program_id(1)

    @pl.when(l == 0)
    def _():
        acc_ref[...] = x_ref[0].astype(jnp.float32)      # load embedding once per batch elem

    x = acc_ref[...]                                     # (S, H) f32
    S, H = x.shape
    nh, dh = wq_ref.shape[1], wq_ref.shape[3]
    scale = 1.0 / (float(dh) ** 0.5)

    # Additive key-padding bias built in-kernel: 0 = attend, -1e9 = padded.
    key_bias = jnp.where(mask_ref[0] > 0, 0.0, -1e9).astype(jnp.float32)   # (1, S)

    # ---- Multi-head self-attention, head-batched (no in-kernel transposes) ----
    xb = jnp.broadcast_to(x.astype(jnp.bfloat16)[None], (nh, S, H))        # (NH, S, H)
    q = jnp.einsum('nsh,nhd->nsd', xb, wq_ref[0],
                   preferred_element_type=jnp.float32) + bq_ref[0]         # (NH, S, dh)
    k = jnp.einsum('nsh,nhd->nsd', xb, wk_ref[0],
                   preferred_element_type=jnp.float32) + bk_ref[0]
    v = jnp.einsum('nsh,nhd->nsd', xb, wv_ref[0],
                   preferred_element_type=jnp.float32) + bv_ref[0]

    scores = jnp.einsum('nqd,nkd->nqk',
                        q.astype(jnp.bfloat16), k.astype(jnp.bfloat16),
                        preferred_element_type=jnp.float32) * scale        # (NH, S, S)
    scores = scores + key_bias[None]                                       # mask padded keys (f32)
    scores = scores - jnp.max(scores, axis=-1, keepdims=True)
    p = jnp.exp(scores)
    p = p * pl.reciprocal(jnp.sum(p, axis=-1, keepdims=True), approx=True)

    ctx = jnp.einsum('nqk,nkd->nqd',
                     p.astype(jnp.bfloat16), v.astype(jnp.bfloat16),
                     preferred_element_type=jnp.float32)                   # (NH, S, dh)
    proj = jnp.einsum('nsd,ndh->nsh',
                      ctx.astype(jnp.bfloat16), wo_ref[0],
                      preferred_element_type=jnp.float32)                  # (NH, S, H)
    attn = jnp.sum(proj, axis=0) + bo_ref[0]                               # (S, H)

    # ---- residual + LayerNorm1 (post-norm; dropout identity in eval) ----
    x1 = _layernorm(x + attn, ln1g_ref[0], ln1b_ref[0])

    # ---- Feed-forward: Linear -> ReLU -> Linear ----
    hdn = jnp.dot(x1.astype(jnp.bfloat16), w1_ref[0],
                  preferred_element_type=jnp.float32) + b1_ref[0]
    hdn = jnp.maximum(hdn, 0.0)
    ff = jnp.dot(hdn.astype(jnp.bfloat16), w2_ref[0],
                 preferred_element_type=jnp.float32) + b2_ref[0]

    # ---- residual + LayerNorm2 ----
    x2 = _layernorm(x1 + ff, ln2g_ref[0], ln2b_ref[0])
    acc_ref[...] = x2

    # ---- QA head fused into the last layer: lane-dense (2, S) logits ----
    @pl.when(l == pl.num_programs(1) - 1)
    def _():
        logits = jnp.einsum('oh,sh->os',
                            wqa_ref[...], x2.astype(jnp.bfloat16),
                            preferred_element_type=jnp.float32) + bqa_ref[...]   # (2, S)
        out_ref[0] = logits.astype(out_ref.dtype)


def _pack_layer(p, num_heads):
    """PyTorch-layout encoder-layer params -> kernel layout (head-major, pre-transposed, bf16 MXU weights)."""
    (wqkv, bqkv, wo, bo, ln1g, ln1b, w1, b1, w2, b2, ln2g, ln2b) = p
    H = wo.shape[0]
    dh = H // num_heads

    def heads_w(w):   # (H_out, H_in) -> (NH, H_in, dh)
        return w.reshape(num_heads, dh, H).transpose(0, 2, 1)

    def heads_b(b):   # (H,) -> (NH, 1, dh)
        return b.reshape(num_heads, 1, dh)

    wq, wk, wv = wqkv[:H], wqkv[H:2 * H], wqkv[2 * H:]
    bq, bk, bv = bqkv[:H], bqkv[H:2 * H], bqkv[2 * H:]
    f32, bf16 = jnp.float32, jnp.bfloat16
    return (
        heads_w(wq).astype(bf16), heads_b(bq).astype(f32),
        heads_w(wk).astype(bf16), heads_b(bk).astype(f32),
        heads_w(wv).astype(bf16), heads_b(bv).astype(f32),
        wo.T.reshape(num_heads, dh, H).astype(bf16), bo.reshape(1, H).astype(f32),
        ln1g.reshape(1, H).astype(f32), ln1b.reshape(1, H).astype(f32),
        w1.T.astype(bf16), b1.reshape(1, -1).astype(f32),
        w2.T.astype(bf16), b2.reshape(1, H).astype(f32),
        ln2g.reshape(1, H).astype(f32), ln2b.reshape(1, H).astype(f32),
    )


def pack_params(layer_params, num_heads):
    """Stack per-layer packed params along a leading layer axis."""
    packed = [_pack_layer(p, num_heads) for p in layer_params]
    return tuple(jnp.stack([lay[i] for lay in packed], axis=0)
                 for i in range(len(packed[0])))


def fine_tune_student_qa_forward(input_ids, attention_mask, emb_table, layer_params,
                                 wqa, bqa, num_heads=NUM_HEADS):
    B, S = input_ids.shape
    H = emb_table.shape[1]
    L = len(layer_params)

    # Embedding lookup (gather) — plain-JAX glue.
    x = jnp.take(emb_table, input_ids, axis=0).astype(jnp.float32)        # (B, S, H)

    if attention_mask is None:
        attention_mask = jnp.ones((B, S), jnp.int32)
    mask = attention_mask.astype(jnp.int32).reshape(B, 1, S)

    stacked = pack_params(layer_params, num_heads)
    wqa_k = wqa.astype(jnp.bfloat16)                                      # (2, H)
    bqa_k = bqa.reshape(2, 1).astype(jnp.float32)                         # (2, 1)

    in_specs = [pl.BlockSpec((1, S, H), lambda b, l: (b, 0, 0)),          # activation (fetched once per b)
                pl.BlockSpec((1, 1, S), lambda b, l: (b, 0, 0))]          # int mask   (fetched once per b)
    for p in stacked:                                                     # layer-stacked weights
        nd = p.ndim
        in_specs.append(pl.BlockSpec((1,) + p.shape[1:],
                                     lambda b, l, _nd=nd: (l,) + (0,) * (_nd - 1)))
    in_specs += [pl.BlockSpec(wqa_k.shape, lambda b, l: (0, 0)),          # QA head (constant)
                 pl.BlockSpec(bqa_k.shape, lambda b, l: (0, 0))]

    # NOTE(v7x): for large H/FFN, also set pltpu.CompilerParams(vmem_limit_bytes=...)
    # and shrink/bucket the stacked-weight blocks to fit the 64 MiB VMEM.
    logits = pl.pallas_call(
        fused_student_qa_kernel,
        out_shape=jax.ShapeDtypeStruct((B, 2, S), jnp.float32),
        grid_spec=pltpu.PrefetchScalarGridSpec(
            num_scalar_prefetch=0,
            grid=(B, L),
            in_specs=in_specs,
            out_specs=pl.BlockSpec((1, 2, S), lambda b, l: (b, 0, 0)),
            scratch_shapes=[pltpu.VMEM((S, H), jnp.float32)],             # resident activation
        ),
        compiler_params=pltpu.CompilerParams(
            dimension_semantics=("parallel", "arbitrary")),
    )(x, mask, *stacked, wqa_k, bqa_k)

    start_logits = logits[:, 0, :]                                        # (B, S)
    end_logits = logits[:, 1, :]                                          # (B, S)
    return start_logits, end_logits


def make_params(key, num_layers, vocab, hidden, ffn):
    """PyTorch-layout parameters (nn.TransformerEncoderLayer / nn.Linear conventions)."""
    keys = jax.random.split(key, 2 + num_layers)
    emb_table = jax.random.normal(keys[0], (vocab, hidden), jnp.float32) * 0.02

    layer_params = []
    for l in range(num_layers):
        k = jax.random.split(keys[2 + l], 4)
        wqkv = jax.random.normal(k[0], (3 * hidden, hidden), jnp.float32) * 0.05
        bqkv = jnp.zeros((3 * hidden,), jnp.float32)
        wo = jax.random.normal(k[1], (hidden, hidden), jnp.float32) * 0.05
        bo = jnp.zeros((hidden,), jnp.float32)
        ln1g = jnp.ones((hidden,), jnp.float32)
        ln1b = jnp.zeros((hidden,), jnp.float32)
        w1 = jax.random.normal(k[2], (ffn, hidden), jnp.float32) * 0.05
        b1 = jnp.zeros((ffn,), jnp.float32)
        w2 = jax.random.normal(k[3], (hidden, ffn), jnp.float32) * 0.05
        b2 = jnp.zeros((hidden,), jnp.float32)
        ln2g = jnp.ones((hidden,), jnp.float32)
        ln2b = jnp.zeros((hidden,), jnp.float32)
        layer_params.append((wqkv, bqkv, wo, bo, ln1g, ln1b,
                             w1, b1, w2, b2, ln2g, ln2b))

    wqa = jax.random.normal(keys[1], (2, hidden), jnp.float32) * 0.05
    bqa = jnp.zeros((2,), jnp.float32)
    return emb_table, layer_params, wqa, bqa


if __name__ == "__main__":
    B, S, H, FFN, VOCAB, NUM_LAYERS = 2, 8, 32, 64, 100, 2

    key = jax.random.PRNGKey(0)
    k_ids, k_params = jax.random.split(key)

    input_ids = jax.random.randint(k_ids, (B, S), 0, VOCAB, dtype=jnp.int32)
    attention_mask = jnp.array([[1, 1, 1, 1, 1, 1, 1, 1],
                                [1, 1, 1, 1, 1, 1, 0, 0]], dtype=jnp.int32)

    emb_table, layer_params, wqa, bqa = make_params(k_params, NUM_LAYERS, VOCAB, H, FFN)

    start_logits, end_logits = fine_tune_student_qa_forward(
        input_ids, attention_mask, emb_table, layer_params, wqa, bqa)

    jax.block_until_ready((start_logits, end_logits))
    assert start_logits.shape == (B, S) and end_logits.shape == (B, S)
    assert bool(jnp.all(jnp.isfinite(start_logits))) and bool(jnp.all(jnp.isfinite(end_logits)))
    print("KERNEL_OK")
</pallas_src>

<mosaic_0001>
module attributes {stable_mosaic.version = 11 : i64} {
  func.func @fused_student_qa_kernel(%arg0: i32, %arg1: i32, %arg2: memref<1x8x32xf32, #tpu.memory_space<vmem>>, %arg3: memref<1x1x8xi32, #tpu.memory_space<vmem>>, %arg4: memref<1x4x32x8xbf16, #tpu.memory_space<vmem>>, %arg5: memref<1x4x1x8xf32, #tpu.memory_space<vmem>>, %arg6: memref<1x4x32x8xbf16, #tpu.memory_space<vmem>>, %arg7: memref<1x4x1x8xf32, #tpu.memory_space<vmem>>, %arg8: memref<1x4x32x8xbf16, #tpu.memory_space<vmem>>, %arg9: memref<1x4x1x8xf32, #tpu.memory_space<vmem>>, %arg10: memref<1x4x8x32xbf16, #tpu.memory_space<vmem>>, %arg11: memref<1x1x32xf32, #tpu.memory_space<vmem>>, %arg12: memref<1x1x32xf32, #tpu.memory_space<vmem>>, %arg13: memref<1x1x32xf32, #tpu.memory_space<vmem>>, %arg14: memref<1x32x64xbf16, #tpu.memory_space<vmem>>, %arg15: memref<1x1x64xf32, #tpu.memory_space<vmem>>, %arg16: memref<1x64x32xbf16, #tpu.memory_space<vmem>>, %arg17: memref<1x1x32xf32, #tpu.memory_space<vmem>>, %arg18: memref<1x1x32xf32, #tpu.memory_space<vmem>>, %arg19: memref<1x1x32xf32, #tpu.memory_space<vmem>>, %arg20: memref<2x32xbf16, #tpu.memory_space<vmem>>, %arg21: memref<2x1xf32, #tpu.memory_space<vmem>>, %arg22: memref<1x2x8xf32, #tpu.memory_space<vmem>>, %arg23: memref<8x32xf32, #tpu.memory_space<vmem>>) attributes {dimension_semantics = [#tpu.dimension_semantics<parallel>, #tpu.dimension_semantics<arbitrary>], iteration_bounds = array<i64: 2, 2>, scalar_prefetch = 0 : i64, scratch_operands = 1 : i64, tpu.core_type = #tpu.core_type<tc>, window_params = [{transform_indices = @transform_0, window_bounds = array<i64: 1, 8, 32>}, {transform_indices = @transform_1, window_bounds = array<i64: 1, 1, 8>}, {transform_indices = @transform_2, window_bounds = array<i64: 1, 4, 32, 8>}, {transform_indices = @transform_3, window_bounds = array<i64: 1, 4, 1, 8>}, {transform_indices = @transform_4, window_bounds = array<i64: 1, 4, 32, 8>}, {transform_indices = @transform_5, window_bounds = array<i64: 1, 4, 1, 8>}, {transform_indices = @transform_6, window_bounds = array<i64: 1, 4, 32, 8>}, {transform_indices = @transform_7, window_bounds = array<i64: 1, 4, 1, 8>}, {transform_indices = @transform_8, window_bounds = array<i64: 1, 4, 8, 32>}, {transform_indices = @transform_9, window_bounds = array<i64: 1, 1, 32>}, {transform_indices = @transform_10, window_bounds = array<i64: 1, 1, 32>}, {transform_indices = @transform_11, window_bounds = array<i64: 1, 1, 32>}, {transform_indices = @transform_12, window_bounds = array<i64: 1, 32, 64>}, {transform_indices = @transform_13, window_bounds = array<i64: 1, 1, 64>}, {transform_indices = @transform_14, window_bounds = array<i64: 1, 64, 32>}, {transform_indices = @transform_15, window_bounds = array<i64: 1, 1, 32>}, {transform_indices = @transform_16, window_bounds = array<i64: 1, 1, 32>}, {transform_indices = @transform_17, window_bounds = array<i64: 1, 1, 32>}, {pipeline_mode = #tpu.pipeline_mode<synchronous>, transform_indices = @transform_18, window_bounds = array<i64: 2, 32>}, {pipeline_mode = #tpu.pipeline_mode<synchronous>, transform_indices = @transform_19, window_bounds = array<i64: 2, 1>}, {transform_indices = @transform_20, window_bounds = array<i64: 1, 2, 8>}]} {
    %c0_i32 = arith.constant 0 : i32
    %0 = arith.cmpi eq, %arg1, %c0_i32 : i32
    %1 = arith.extui %0 : i1 to i32
    %c0_i32_0 = arith.constant 0 : i32
    %2 = arith.cmpi ne, %1, %c0_i32_0 : i32
    scf.if %2 {
      %c0_88 = arith.constant 0 : index
      %c0_89 = arith.constant 0 : index
      %c0_90 = arith.constant 0 : index
      %142 = vector.load %arg2[%c0_88, %c0_89, %c0_90] : memref<1x8x32xf32, #tpu.memory_space<vmem>>, vector<1x8x32xf32>
      %143 = vector.shape_cast %142 : vector<1x8x32xf32> to vector<8x32xf32>
      %c0_91 = arith.constant 0 : index
      %c0_92 = arith.constant 0 : index
      %144 = vector.load %arg23[%c0_91, %c0_92] : memref<8x32xf32, #tpu.memory_space<vmem>>, vector<8x32xf32>
      tpu.vector_store %arg23[%c0_91, %c0_92], %143 {strides = array<i32>} : memref<8x32xf32, #tpu.memory_space<vmem>>, vector<8x32xf32>,
    } else {
    }
    %c0 = arith.constant 0 : index
    %c0_1 = arith.constant 0 : index
    %3 = vector.load %arg23[%c0, %c0_1] : memref<8x32xf32, #tpu.memory_space<vmem>>, vector<8x32xf32>
    %c0_2 = arith.constant 0 : index
    %c0_3 = arith.constant 0 : index
    %c0_4 = arith.constant 0 : index
    %4 = vector.load %arg3[%c0_2, %c0_3, %c0_4] : memref<1x1x8xi32, #tpu.memory_space<vmem>>, vector<1x1x8xi32>
    %5 = vector.shape_cast %4 : vector<1x1x8xi32> to vector<1x8xi32>
    %c0_i32_5 = arith.constant 0 : i32
    %6 = vector.broadcast %c0_i32_5 : i32 to vector<1x8xi32>
    %7 = arith.cmpi sgt, %5, %6 : vector<1x8xi32>
    %cst = arith.constant 0.000000e+00 : f32
    %cst_6 = arith.constant -1.000000e+09 : f32
    %8 = vector.broadcast %cst : f32 to vector<1x8xf32>
    %9 = vector.broadcast %cst_6 : f32 to vector<1x8xf32>
    %10 = arith.select %7, %8, %9 : vector<1x8xi1>, vector<1x8xf32>
    %11 = arith.truncf %3 : vector<8x32xf32> to vector<8x32xbf16>
    %12 = vector.shape_cast %11 : vector<8x32xbf16> to vector<1x8x32xbf16>
    %13 = vector.shape_cast %12 : vector<1x8x32xbf16> to vector<1x8x32xbf16>
    %14 = vector.broadcast %13 : vector<1x8x32xbf16> to vector<4x8x32xbf16>
    %c0_7 = arith.constant 0 : index
    %c0_8 = arith.constant 0 : index
    %c0_9 = arith.constant 0 : index
    %c0_10 = arith.constant 0 : index
    %15 = vector.load %arg4[%c0_7, %c0_8, %c0_9, %c0_10] : memref<1x4x32x8xbf16, #tpu.memory_space<vmem>>, vector<1x4x32x8xbf16>
    %16 = vector.shape_cast %15 : vector<1x4x32x8xbf16> to vector<4x32x8xbf16>
    "tpu.trace_start"() <{level = 10 : i32, message = "nsh,nhd->nsd"}> : () -> ()
    %cst_11 = arith.constant dense<0.000000e+00> : vector<4x8x8xf32>
    %17 = tpu.matmul %14, %16, %cst_11 {dimension_numbers = #tpu.dot_dimension_numbers<[2], [1], [1], [2], [0, 0, 0, 1, 1, 2], [0], [0]>} : vector<4x8x32xbf16>, vector<4x32x8xbf16>, vector<4x8x8xf32> -> vector<4x8x8xf32>
    "tpu.trace_stop"() : () -> ()
    %c0_12 = arith.constant 0 : index
    %c0_13 = arith.constant 0 : index
    %c0_14 = arith.constant 0 : index
    %c0_15 = arith.constant 0 : index
    %18 = vector.load %arg5[%c0_12, %c0_13, %c0_14, %c0_15] : memref<1x4x1x8xf32, #tpu.memory_space<vmem>>, vector<1x4x1x8xf32>
    %19 = vector.shape_cast %18 : vector<1x4x1x8xf32> to vector<4x1x8xf32>
    %20 = vector.broadcast %19 : vector<4x1x8xf32> to vector<4x8x8xf32>
    %21 = arith.addf %17, %20 : vector<4x8x8xf32>
    %c0_16 = arith.constant 0 : index
    %c0_17 = arith.constant 0 : index
    %c0_18 = arith.constant 0 : index
    %c0_19 = arith.constant 0 : index
    %22 = vector.load %arg6[%c0_16, %c0_17, %c0_18, %c0_19] : memref<1x4x32x8xbf16, #tpu.memory_space<vmem>>, vector<1x4x32x8xbf16>
    %23 = vector.shape_cast %22 : vector<1x4x32x8xbf16> to vector<4x32x8xbf16>
    "tpu.trace_start"() <{level = 10 : i32, message = "nsh,nhd->nsd"}> : () -> ()
    %cst_20 = arith.constant dense<0.000000e+00> : vector<4x8x8xf32>
    %24 = tpu.matmul %14, %23, %cst_20 {dimension_numbers = #tpu.dot_dimension_numbers<[2], [1], [1], [2], [0, 0, 0, 1, 1, 2], [0], [0]>} : vector<4x8x32xbf16>, vector<4x32x8xbf16>, vector<4x8x8xf32> -> vector<4x8x8xf32>
    "tpu.trace_stop"() : () -> ()
    %c0_21 = arith.constant 0 : index
    %c0_22 = arith.constant 0 : index
    %c0_23 = arith.constant 0 : index
    %c0_24 = arith.constant 0 : index
    %25 = vector.load %arg7[%c0_21, %c0_22, %c0_23, %c0_24] : memref<1x4x1x8xf32, #tpu.memory_space<vmem>>, vector<1x4x1x8xf32>
    %26 = vector.shape_cast %25 : vector<1x4x1x8xf32> to vector<4x1x8xf32>
    %27 = vector.broadcast %26 : vector<4x1x8xf32> to vector<4x8x8xf32>
    %28 = arith.addf %24, %27 : vector<4x8x8xf32>
    %c0_25 = arith.constant 0 : index
    %c0_26 = arith.constant 0 : index
    %c0_27 = arith.constant 0 : index
    %c0_28 = arith.constant 0 : index
    %29 = vector.load %arg8[%c0_25, %c0_26, %c0_27, %c0_28] : memref<1x4x32x8xbf16, #tpu.memory_space<vmem>>, vector<1x4x32x8xbf16>
    %30 = vector.shape_cast %29 : vector<1x4x32x8xbf16> to vector<4x32x8xbf16>
    "tpu.trace_start"() <{level = 10 : i32, message = "nsh,nhd->nsd"}> : () -> ()
    %cst_29 = arith.constant dense<0.000000e+00> : vector<4x8x8xf32>
    %31 = tpu.matmul %14, %30, %cst_29 {dimension_numbers = #tpu.dot_dimension_numbers<[2], [1], [1], [2], [0, 0, 0, 1, 1, 2], [0], [0]>} : vector<4x8x32xbf16>, vector<4x32x8xbf16>, vector<4x8x8xf32> -> vector<4x8x8xf32>
    "tpu.trace_stop"() : () -> ()
    %c0_30 = arith.constant 0 : index
    %c0_31 = arith.constant 0 : index
    %c0_32 = arith.constant 0 : index
    %c0_33 = arith.constant 0 : index
    %32 = vector.load %arg9[%c0_30, %c0_31, %c0_32, %c0_33] : memref<1x4x1x8xf32, #tpu.memory_space<vmem>>, vector<1x4x1x8xf32>
    %33 = vector.shape_cast %32 : vector<1x4x1x8xf32> to vector<4x1x8xf32>
    %34 = vector.broadcast %33 : vector<4x1x8xf32> to vector<4x8x8xf32>
    %35 = arith.addf %31, %34 : vector<4x8x8xf32>
    %36 = arith.truncf %21 : vector<4x8x8xf32> to vector<4x8x8xbf16>
    %37 = arith.truncf %28 : vector<4x8x8xf32> to vector<4x8x8xbf16>
    "tpu.trace_start"() <{level = 10 : i32, message = "nqd,nkd->nqk"}> : () -> ()
    %cst_34 = arith.constant dense<0.000000e+00> : vector<4x8x8xf32>
    %38 = tpu.matmul %36, %37, %cst_34 {dimension_numbers = #tpu.dot_dimension_numbers<[2], [2], [1], [1], [0, 0, 0, 1, 1, 1], [0], [0]>} : vector<4x8x8xbf16>, vector<4x8x8xbf16>, vector<4x8x8xf32> -> vector<4x8x8xf32>
    "tpu.trace_stop"() : () -> ()
    %cst_35 = arith.constant 0.353553385 : f32
    %39 = vector.broadcast %cst_35 : f32 to vector<4x8x8xf32>
    %40 = arith.mulf %38, %39 : vector<4x8x8xf32>
    %41 = vector.shape_cast %10 : vector<1x8xf32> to vector<1x1x8xf32>
    %42 = vector.broadcast %41 : vector<1x1x8xf32> to vector<4x8x8xf32>
    %43 = arith.addf %40, %42 : vector<4x8x8xf32>
    %cst_36 = arith.constant dense<0xFF800000> : vector<4x8xf32>
    %44 = vector.multi_reduction <maximumf>, %43, %cst_36 [2] : vector<4x8x8xf32> to vector<4x8xf32>
    %45 = vector.shape_cast %44 : vector<4x8xf32> to vector<4x8x1xf32>
    %46 = vector.broadcast %45 : vector<4x8x1xf32> to vector<4x8x8xf32>
    %47 = arith.subf %43, %46 : vector<4x8x8xf32>
    %48 = math.exp %47 : vector<4x8x8xf32>
    %cst_37 = arith.constant dense<0.000000e+00> : vector<4x8xf32>
    %49 = vector.multi_reduction <add>, %48, %cst_37 [2] : vector<4x8x8xf32> to vector<4x8xf32>
    %50 = vector.shape_cast %49 : vector<4x8xf32> to vector<4x8x1xf32>
    %51 = tpu.reciprocal %50 {approx = true} : vector<4x8x1xf32> -> vector<4x8x1xf32>
    %52 = vector.broadcast %51 : vector<4x8x1xf32> to vector<4x8x8xf32>
    %53 = arith.mulf %48, %52 : vector<4x8x8xf32>
    %54 = arith.truncf %53 : vector<4x8x8xf32> to vector<4x8x8xbf16>
    %55 = arith.truncf %35 : vector<4x8x8xf32> to vector<4x8x8xbf16>
    "tpu.trace_start"() <{level = 10 : i32, message = "nqk,nkd->nqd"}> : () -> ()
    %cst_38 = arith.constant dense<0.000000e+00> : vector<4x8x8xf32>
    %56 = tpu.matmul %54, %55, %cst_38 {dimension_numbers = #tpu.dot_dimension_numbers<[2], [1], [1], [2], [0, 0, 0, 1, 1, 2], [0], [0]>} : vector<4x8x8xbf16>, vector<4x8x8xbf16>, vector<4x8x8xf32> -> vector<4x8x8xf32>
    "tpu.trace_stop"() : () -> ()
    %57 = arith.truncf %56 : vector<4x8x8xf32> to vector<4x8x8xbf16>
    %c0_39 = arith.constant 0 : index
    %c0_40 = arith.constant 0 : index
    %c0_41 = arith.constant 0 : index
    %c0_42 = arith.constant 0 : index
    %58 = vector.load %arg10[%c0_39, %c0_40, %c0_41, %c0_42] : memref<1x4x8x32xbf16, #tpu.memory_space<vmem>>, vector<1x4x8x32xbf16>
    %59 = vector.shape_cast %58 : vector<1x4x8x32xbf16> to vector<4x8x32xbf16>
    "tpu.trace_start"() <{level = 10 : i32, message = "nsd,ndh->nsh"}> : () -> ()
    %cst_43 = arith.constant dense<0.000000e+00> : vector<4x8x32xf32>
    %60 = tpu.matmul %57, %59, %cst_43 {dimension_numbers = #tpu.dot_dimension_numbers<[2], [1], [1], [2], [0, 0, 0, 1, 1, 2], [0], [0]>} : vector<4x8x8xbf16>, vector<4x8x32xbf16>, vector<4x8x32xf32> -> vector<4x8x32xf32>
    "tpu.trace_stop"() : () -> ()
    %cst_44 = arith.constant dense<0.000000e+00> : vector<8x32xf32>
    %61 = vector.multi_reduction <add>, %60, %cst_44 [0] : vector<4x8x32xf32> to vector<8x32xf32>
    %c0_45 = arith.constant 0 : index
    %c0_46 = arith.constant 0 : index
    %c0_47 = arith.constant 0 : index
    %62 = vector.load %arg11[%c0_45, %c0_46, %c0_47] : memref<1x1x32xf32, #tpu.memory_space<vmem>>, vector<1x1x32xf32>
    %63 = vector.shape_cast %62 : vector<1x1x32xf32> to vector<1x32xf32>
    %64 = vector.broadcast %63 : vector<1x32xf32> to vector<8x32xf32>
    %65 = arith.addf %61, %64 : vector<8x32xf32>
    %66 = arith.addf %3, %65 : vector<8x32xf32>
    %c0_48 = arith.constant 0 : index
    %c0_49 = arith.constant 0 : index
    %c0_50 = arith.constant 0 : index
    %67 = vector.load %arg12[%c0_48, %c0_49, %c0_50] : memref<1x1x32xf32, #tpu.memory_space<vmem>>, vector<1x1x32xf32>
    %68 = vector.shape_cast %67 : vector<1x1x32xf32> to vector<1x32xf32>
    %c0_51 = arith.constant 0 : index
    %c0_52 = arith.constant 0 : index
    %c0_53 = arith.constant 0 : index
    %69 = vector.load %arg13[%c0_51, %c0_52, %c0_53] : memref<1x1x32xf32, #tpu.memory_space<vmem>>, vector<1x1x32xf32>
    %70 = vector.shape_cast %69 : vector<1x1x32xf32> to vector<1x32xf32>
    %cst_54 = arith.constant dense<0.000000e+00> : vector<8xf32>
    %71 = vector.multi_reduction <add>, %66, %cst_54 [1] : vector<8x32xf32> to vector<8xf32>
    %72 = vector.shape_cast %71 : vector<8xf32> to vector<8x1xf32>
    %cst_55 = arith.constant 3.200000e+01 : f32
    %73 = vector.broadcast %cst_55 : f32 to vector<8x1xf32>
    %74 = arith.divf %72, %73 : vector<8x1xf32>
    %75 = vector.broadcast %74 : vector<8x1xf32> to vector<8x32xf32>
    %76 = arith.subf %66, %75 : vector<8x32xf32>
    %77 = arith.mulf %76, %76 : vector<8x32xf32>
    %cst_56 = arith.constant dense<0.000000e+00> : vector<8xf32>
    %78 = vector.multi_reduction <add>, %77, %cst_56 [1] : vector<8x32xf32> to vector<8xf32>
    %79 = vector.shape_cast %78 : vector<8xf32> to vector<8x1xf32>
    %cst_57 = arith.constant 3.200000e+01 : f32
    %80 = vector.broadcast %cst_57 : f32 to vector<8x1xf32>
    %81 = arith.divf %79, %80 : vector<8x1xf32>
    %82 = vector.broadcast %74 : vector<8x1xf32> to vector<8x32xf32>
    %83 = arith.subf %66, %82 : vector<8x32xf32>
    %cst_58 = arith.constant 9.99999974E-6 : f32
    %84 = vector.broadcast %cst_58 : f32 to vector<8x1xf32>
    %85 = arith.addf %81, %84 : vector<8x1xf32>
    %86 = math.rsqrt %85 : vector<8x1xf32>
    %87 = vector.broadcast %86 : vector<8x1xf32> to vector<8x32xf32>
    %88 = arith.mulf %83, %87 : vector<8x32xf32>
    %89 = vector.broadcast %68 : vector<1x32xf32> to vector<8x32xf32>
    %90 = arith.mulf %88, %89 : vector<8x32xf32>
    %91 = vector.broadcast %70 : vector<1x32xf32> to vector<8x32xf32>
    %92 = arith.addf %90, %91 : vector<8x32xf32>
    %93 = arith.truncf %92 : vector<8x32xf32> to vector<8x32xbf16>
    %c0_59 = arith.constant 0 : index
    %c0_60 = arith.constant 0 : index
    %c0_61 = arith.constant 0 : index
    %94 = vector.load %arg14[%c0_59, %c0_60, %c0_61] : memref<1x32x64xbf16, #tpu.memory_space<vmem>>, vector<1x32x64xbf16>
    %95 = vector.shape_cast %94 : vector<1x32x64xbf16> to vector<32x64xbf16>
    %cst_62 = arith.constant dense<0.000000e+00> : vector<8x64xf32>
    %96 = tpu.matmul %93, %95, %cst_62 {dimension_numbers = #tpu.dot_dimension_numbers<[1], [0], [0], [1], [0, 0, 1, 1], [], []>} : vector<8x32xbf16>, vector<32x64xbf16>, vector<8x64xf32> -> vector<8x64xf32>
    %c0_63 = arith.constant 0 : index
    %c0_64 = arith.constant 0 : index
    %c0_65 = arith.constant 0 : index
    %97 = vector.load %arg15[%c0_63, %c0_64, %c0_65] : memref<1x1x64xf32, #tpu.memory_space<vmem>>, vector<1x1x64xf32>
    %98 = vector.shape_cast %97 : vector<1x1x64xf32> to vector<1x64xf32>
    %99 = vector.broadcast %98 : vector<1x64xf32> to vector<8x64xf32>
    %100 = arith.addf %96, %99 : vector<8x64xf32>
    %cst_66 = arith.constant 0.000000e+00 : f32
    %101 = vector.broadcast %cst_66 : f32 to vector<8x64xf32>
    %102 = arith.maximumf %100, %101 : vector<8x64xf32>
    %103 = arith.truncf %102 : vector<8x64xf32> to vector<8x64xbf16>
    %c0_67 = arith.constant 0 : index
    %c0_68 = arith.constant 0 : index
    %c0_69 = arith.constant 0 : index
    %104 = vector.load %arg16[%c0_67, %c0_68, %c0_69] : memref<1x64x32xbf16, #tpu.memory_space<vmem>>, vector<1x64x32xbf16>
    %105 = vector.shape_cast %104 : vector<1x64x32xbf16> to vector<64x32xbf16>
    %cst_70 = arith.constant dense<0.000000e+00> : vector<8x32xf32>
    %106 = tpu.matmul %103, %105, %cst_70 {dimension_numbers = #tpu.dot_dimension_numbers<[1], [0], [0], [1], [0, 0, 1, 1], [], []>} : vector<8x64xbf16>, vector<64x32xbf16>, vector<8x32xf32> -> vector<8x32xf32>
    %c0_71 = arith.constant 0 : index
    %c0_72 = arith.constant 0 : index
    %c0_73 = arith.constant 0 : index
    %107 = vector.load %arg17[%c0_71, %c0_72, %c0_73] : memref<1x1x32xf32, #tpu.memory_space<vmem>>, vector<1x1x32xf32>
    %108 = vector.shape_cast %107 : vector<1x1x32xf32> to vector<1x32xf32>
    %109 = vector.broadcast %108 : vector<1x32xf32> to vector<8x32xf32>
    %110 = arith.addf %106, %109 : vector<8x32xf32>
    %111 = arith.addf %92, %110 : vector<8x32xf32>
    %c0_74 = arith.constant 0 : index
    %c0_75 = arith.constant 0 : index
    %c0_76 = arith.constant 0 : index
    %112 = vector.load %arg18[%c0_74, %c0_75, %c0_76] : memref<1x1x32xf32, #tpu.memory_space<vmem>>, vector<1x1x32xf32>
    %113 = vector.shape_cast %112 : vector<1x1x32xf32> to vector<1x32xf32>
    %c0_77 = arith.constant 0 : index
    %c0_78 = arith.constant 0 : index
    %c0_79 = arith.constant 0 : index
    %114 = vector.load %arg19[%c0_77, %c0_78, %c0_79] : memref<1x1x32xf32, #tpu.memory_space<vmem>>, vector<1x1x32xf32>
    %115 = vector.shape_cast %114 : vector<1x1x32xf32> to vector<1x32xf32>
    %cst_80 = arith.constant dense<0.000000e+00> : vector<8xf32>
    %116 = vector.multi_reduction <add>, %111, %cst_80 [1] : vector<8x32xf32> to vector<8xf32>
    %117 = vector.shape_cast %116 : vector<8xf32> to vector<8x1xf32>
    %cst_81 = arith.constant 3.200000e+01 : f32
    %118 = vector.broadcast %cst_81 : f32 to vector<8x1xf32>
    %119 = arith.divf %117, %118 : vector<8x1xf32>
    %120 = vector.broadcast %119 : vector<8x1xf32> to vector<8x32xf32>
    %121 = arith.subf %111, %120 : vector<8x32xf32>
    %122 = arith.mulf %121, %121 : vector<8x32xf32>
    %cst_82 = arith.constant dense<0.000000e+00> : vector<8xf32>
    %123 = vector.multi_reduction <add>, %122, %cst_82 [1] : vector<8x32xf32> to vector<8xf32>
    %124 = vector.shape_cast %123 : vector<8xf32> to vector<8x1xf32>
    %cst_83 = arith.constant 3.200000e+01 : f32
    %125 = vector.broadcast %cst_83 : f32 to vector<8x1xf32>
    %126 = arith.divf %124, %125 : vector<8x1xf32>
    %127 = vector.broadcast %119 : vector<8x1xf32> to vector<8x32xf32>
    %128 = arith.subf %111, %127 : vector<8x32xf32>
    %cst_84 = arith.constant 9.99999974E-6 : f32
    %129 = vector.broadcast %cst_84 : f32 to vector<8x1xf32>
    %130 = arith.addf %126, %129 : vector<8x1xf32>
    %131 = math.rsqrt %130 : vector<8x1xf32>
    %132 = vector.broadcast %131 : vector<8x1xf32> to vector<8x32xf32>
    %133 = arith.mulf %128, %132 : vector<8x32xf32>
    %134 = vector.broadcast %113 : vector<1x32xf32> to vector<8x32xf32>
    %135 = arith.mulf %133, %134 : vector<8x32xf32>
    %136 = vector.broadcast %115 : vector<1x32xf32> to vector<8x32xf32>
    %137 = arith.addf %135, %136 : vector<8x32xf32>
    %c0_85 = arith.constant 0 : index
    %c0_86 = arith.constant 0 : index
    %138 = vector.load %arg23[%c0_85, %c0_86] : memref<8x32xf32, #tpu.memory_space<vmem>>, vector<8x32xf32>
    tpu.vector_store %arg23[%c0_85, %c0_86], %137 {strides = array<i32>} : memref<8x32xf32, #tpu.memory_space<vmem>>, vector<8x32xf32>,
    %c1_i32 = arith.constant 1 : i32
    %139 = arith.cmpi eq, %arg1, %c1_i32 : i32
    %140 = arith.extui %139 : i1 to i32
    %c0_i32_87 = arith.constant 0 : i32
    %141 = arith.cmpi ne, %140, %c0_i32_87 : i32
    scf.if %141 {
      %c0_88 = arith.constant 0 : index
      %c0_89 = arith.constant 0 : index
      %142 = vector.load %arg20[%c0_88, %c0_89] : memref<2x32xbf16, #tpu.memory_space<vmem>>, vector<2x32xbf16>
      %143 = arith.truncf %137 : vector<8x32xf32> to vector<8x32xbf16>
      "tpu.trace_start"() <{level = 10 : i32, message = "oh,sh->os"}> : () -> ()
      %cst_90 = arith.constant dense<0.000000e+00> : vector<2x8xf32>
      %144 = tpu.matmul %142, %143, %cst_90 {dimension_numbers = #tpu.dot_dimension_numbers<[1], [1], [0], [0], [0, 0, 1, 0], [], []>} : vector<2x32xbf16>, vector<8x32xbf16>, vector<2x8xf32> -> vector<2x8xf32>
      "tpu.trace_stop"() : () -> ()
      %c0_91 = arith.constant 0 : index
      %c0_92 = arith.constant 0 : index
      %145 = vector.load %arg21[%c0_91, %c0_92] : memref<2x1xf32, #tpu.memory_space<vmem>>, vector<2x1xf32>
      %146 = vector.broadcast %145 : vector<2x1xf32> to vector<2x8xf32>
      %147 = arith.addf %144, %146 : vector<2x8xf32>
      %c0_93 = arith.constant 0 : index
      %c0_94 = arith.constant 0 : index
      %c0_95 = arith.constant 0 : index
      %148 = vector.load %arg22[%c0_93, %c0_94, %c0_95] : memref<1x2x8xf32, #tpu.memory_space<vmem>>, vector<1x2x8xf32>
      %149 = vector.shape_cast %148 : vector<1x2x8xf32> to vector<2x8xf32>
      %150 = vector.shape_cast %147 : vector<2x8xf32> to vector<1x2x8xf32>
      tpu.vector_store %arg22[%c0_93, %c0_94, %c0_95], %150 {strides = array<i32>} : memref<1x2x8xf32, #tpu.memory_space<vmem>>, vector<1x2x8xf32>,
    } else {
    }
    return
  }
  func.func @transform_0(%arg0: i32, %arg1: i32) -> (i32, i32, i32) {
    %c0_i32 = arith.constant 0 : i32
    %c0_i32_0 = arith.constant 0 : i32
    %c0_i32_1 = arith.constant 0 : i32
    return %arg0, %c0_i32, %c0_i32_0 : i32, i32, i32
  }
  func.func @transform_1(%arg0: i32, %arg1: i32) -> (i32, i32, i32) {
    %c0_i32 = arith.constant 0 : i32
    %c0_i32_0 = arith.constant 0 : i32
    %c0_i32_1 = arith.constant 0 : i32
    return %arg0, %c0_i32, %c0_i32_0 : i32, i32, i32
  }
  func.func @transform_2(%arg0: i32, %arg1: i32) -> (i32, i32, i32, i32) {
    %c0_i32 = arith.constant 0 : i32
    %c0_i32_0 = arith.constant 0 : i32
    %c0_i32_1 = arith.constant 0 : i32
    %c0_i32_2 = arith.constant 0 : i32
    return %arg1, %c0_i32, %c0_i32_0, %c0_i32_1 : i32, i32, i32, i32
  }
  func.func @transform_3(%arg0: i32, %arg1: i32) -> (i32, i32, i32, i32) {
    %c0_i32 = arith.constant 0 : i32
    %c0_i32_0 = arith.constant 0 : i32
    %c0_i32_1 = arith.constant 0 : i32
    %c0_i32_2 = arith.constant 0 : i32
    return %arg1, %c0_i32, %c0_i32_0, %c0_i32_1 : i32, i32, i32, i32
  }
  func.func @transform_4(%arg0: i32, %arg1: i32) -> (i32, i32, i32, i32) {
    %c0_i32 = arith.constant 0 : i32
    %c0_i32_0 = arith.constant 0 : i32
    %c0_i32_1 = arith.constant 0 : i32
    %c0_i32_2 = arith.constant 0 : i32
    return %arg1, %c0_i32, %c0_i32_0, %c0_i32_1 : i32, i32, i32, i32
  }
  func.func @transform_5(%arg0: i32, %arg1: i32) -> (i32, i32, i32, i32) {
    %c0_i32 = arith.constant 0 : i32
    %c0_i32_0 = arith.constant 0 : i32
    %c0_i32_1 = arith.constant 0 : i32
    %c0_i32_2 = arith.constant 0 : i32
    return %arg1, %c0_i32, %c0_i32_0, %c0_i32_1 : i32, i32, i32, i32
  }
  func.func @transform_6(%arg0: i32, %arg1: i32) -> (i32, i32, i32, i32) {
    %c0_i32 = arith.constant 0 : i32
    %c0_i32_0 = arith.constant 0 : i32
    %c0_i32_1 = arith.constant 0 : i32
    %c0_i32_2 = arith.constant 0 : i32
    return %arg1, %c0_i32, %c0_i32_0, %c0_i32_1 : i32, i32, i32, i32
  }
  func.func @transform_7(%arg0: i32, %arg1: i32) -> (i32, i32, i32, i32) {
    %c0_i32 = arith.constant 0 : i32
    %c0_i32_0 = arith.constant 0 : i32
    %c0_i32_1 = arith.constant 0 : i32
    %c0_i32_2 = arith.constant 0 : i32
    return %arg1, %c0_i32, %c0_i32_0, %c0_i32_1 : i32, i32, i32, i32
  }
  func.func @transform_8(%arg0: i32, %arg1: i32) -> (i32, i32, i32, i32) {
    %c0_i32 = arith.constant 0 : i32
    %c0_i32_0 = arith.constant 0 : i32
    %c0_i32_1 = arith.constant 0 : i32
    %c0_i32_2 = arith.constant 0 : i32
    return %arg1, %c0_i32, %c0_i32_0, %c0_i32_1 : i32, i32, i32, i32
  }
  func.func @transform_9(%arg0: i32, %arg1: i32) -> (i32, i32, i32) {
    %c0_i32 = arith.constant 0 : i32
    %c0_i32_0 = arith.constant 0 : i32
    %c0_i32_1 = arith.constant 0 : i32
    return %arg1, %c0_i32, %c0_i32_0 : i32, i32, i32
  }
  func.func @transform_10(%arg0: i32, %arg1: i32) -> (i32, i32, i32) {
    %c0_i32 = arith.constant 0 : i32
    %c0_i32_0 = arith.constant 0 : i32
    %c0_i32_1 = arith.constant 0 : i32
    return %arg1, %c0_i32, %c0_i32_0 : i32, i32, i32
  }
  func.func @transform_11(%arg0: i32, %arg1: i32) -> (i32, i32, i32) {
    %c0_i32 = arith.constant 0 : i32
    %c0_i32_0 = arith.constant 0 : i32
    %c0_i32_1 = arith.constant 0 : i32
    return %arg1, %c0_i32, %c0_i32_0 : i32, i32, i32
  }
  func.func @transform_12(%arg0: i32, %arg1: i32) -> (i32, i32, i32) {
    %c0_i32 = arith.constant 0 : i32
    %c0_i32_0 = arith.constant 0 : i32
    %c0_i32_1 = arith.constant 0 : i32
    return %arg1, %c0_i32, %c0_i32_0 : i32, i32, i32
  }
  func.func @transform_13(%arg0: i32, %arg1: i32) -> (i32, i32, i32) {
    %c0_i32 = arith.constant 0 : i32
    %c0_i32_0 = arith.constant 0 : i32
    %c0_i32_1 = arith.constant 0 : i32
    return %arg1, %c0_i32, %c0_i32_0 : i32, i32, i32
  }
  func.func @transform_14(%arg0: i32, %arg1: i32) -> (i32, i32, i32) {
    %c0_i32 = arith.constant 0 : i32
    %c0_i32_0 = arith.constant 0 : i32
    %c0_i32_1 = arith.constant 0 : i32
    return %arg1, %c0_i32, %c0_i32_0 : i32, i32, i32
  }
  func.func @transform_15(%arg0: i32, %arg1: i32) -> (i32, i32, i32) {
    %c0_i32 = arith.constant 0 : i32
    %c0_i32_0 = arith.constant 0 : i32
    %c0_i32_1 = arith.constant 0 : i32
    return %arg1, %c0_i32, %c0_i32_0 : i32, i32, i32
  }
  func.func @transform_16(%arg0: i32, %arg1: i32) -> (i32, i32, i32) {
    %c0_i32 = arith.constant 0 : i32
    %c0_i32_0 = arith.constant 0 : i32
    %c0_i32_1 = arith.constant 0 : i32
    return %arg1, %c0_i32, %c0_i32_0 : i32, i32, i32
  }
  func.func @transform_17(%arg0: i32, %arg1: i32) -> (i32, i32, i32) {
    %c0_i32 = arith.constant 0 : i32
    %c0_i32_0 = arith.constant 0 : i32
    %c0_i32_1 = arith.constant 0 : i32
    return %arg1, %c0_i32, %c0_i32_0 : i32, i32, i32
  }
  func.func @transform_18(%arg0: i32, %arg1: i32) -> (i32, i32) {
    %c0_i32 = arith.constant 0 : i32
    %c0_i32_0 = arith.constant 0 : i32
    %c0_i32_1 = arith.constant 0 : i32
    return %c0_i32, %c0_i32_0 : i32, i32
  }
  func.func @transform_19(%arg0: i32, %arg1: i32) -> (i32, i32) {
    %c0_i32 = arith.constant 0 : i32
    %c0_i32_0 = arith.constant 0 : i32
    %c0_i32_1 = arith.constant 0 : i32
    return %c0_i32, %c0_i32_0 : i32, i32
  }
  func.func @transform_20(%arg0: i32, %arg1: i32) -> (i32, i32, i32) {
    %c0_i32 = arith.constant 0 : i32
    %c0_i32_0 = arith.constant 0 : i32
    %c0_i32_1 = arith.constant 0 : i32
    return %arg0, %c0_i32, %c0_i32_0 : i32, i32, i32
  }
}

</mosaic_0001>

<llo_original>
// kernel: tpu_custom_call.1
$region0: #{tpu_custom_call.1}
  #allocation0 [shape = 'u32[]', space=smem, size = 0x4, offset = 0x4, fixed_abs, tag = 'smem constant byte address 0x4 - core index']
  #allocation1 [shape = 'u32[144,128]{1,0:T(1,128)}', space=vmem, size = 0x12000, scoped, tag = 'internal scratch']
  #allocation2 [shape = 'f32[8,32]{1,0:T(8,128)}', space=vmem, size = 0x1000, scoped, tag = 'scratch operand']
  %s0 = inlined_call_operand.vmem [shape: f32[2,8,32], index: 0, kind: input, shape index: {}]
  %s1 = inlined_call_operand.vmem [shape: s32[2,1,8], index: 1, kind: input, shape index: {}]
  %s2 = inlined_call_operand.vmem [shape: bf16[2,4,32,8], index: 2, kind: input, shape index: {}]
  %s3 = inlined_call_operand.vmem [shape: f32[2,4,1,8], index: 3, kind: input, shape index: {}]
  %s4 = inlined_call_operand.vmem [shape: bf16[2,4,32,8], index: 4, kind: input, shape index: {}]
  %s5 = inlined_call_operand.vmem [shape: f32[2,4,1,8], index: 5, kind: input, shape index: {}]
  %s6 = inlined_call_operand.vmem [shape: bf16[2,4,32,8], index: 6, kind: input, shape index: {}]
  %s7 = inlined_call_operand.vmem [shape: f32[2,4,1,8], index: 7, kind: input, shape index: {}]
  %s8 = inlined_call_operand.vmem [shape: bf16[2,4,8,32], index: 8, kind: input, shape index: {}]
  %s9 = inlined_call_operand.vmem [shape: f32[2,1,32], index: 9, kind: input, shape index: {}]
  %s10 = inlined_call_operand.vmem [shape: f32[2,1,32], index: 10, kind: input, shape index: {}]
  %s11 = inlined_call_operand.vmem [shape: f32[2,1,32], index: 11, kind: input, shape index: {}]
  %s12 = inlined_call_operand.vmem [shape: bf16[2,32,64], index: 12, kind: input, shape index: {}]
  %s13 = inlined_call_operand.vmem [shape: f32[2,1,64], index: 13, kind: input, shape index: {}]
  %s14 = inlined_call_operand.vmem [shape: bf16[2,64,32], index: 14, kind: input, shape index: {}]
  %s15 = inlined_call_operand.vmem [shape: f32[2,1,32], index: 15, kind: input, shape index: {}]
  %s16 = inlined_call_operand.vmem [shape: f32[2,1,32], index: 16, kind: input, shape index: {}]
  %s17 = inlined_call_operand.vmem [shape: f32[2,1,32], index: 17, kind: input, shape index: {}]
  %s18 = inlined_call_operand.vmem [shape: bf16[2,32], index: 18, kind: input, shape index: {}]
  %s19 = inlined_call_operand.vmem [shape: f32[2,1], index: 19, kind: input, shape index: {}]
  %s20 = inlined_call_operand.hbm [shape: f32[2,2,8], index: 20, kind: output, shape index: {}]
  %s21 = sld [smem:[#allocation0]]
  $region121: #{tpu_custom_call.1} parent=0
    _
  %s23 = ssub.s32 1, %s21
  %s24 = scalar_select 0, %s23, %s21
  $region1: #{tpu_custom_call.1} parent=0
    #allocation3 [shape = 'u8[2048]{0}', space=vmem, size = 0x800, scoped, tag = 'output window, operand 0']
    #allocation4 [shape = 's32[2]{0}', space=sflag, size = 0x8, scoped, tag = 'scoped memory for tpu_custom_call.1']
    %25 = vsyncpa [#allocation4], 0
    %s26 = scalar_lea.sflag [#allocation4], 1
    %27 = vsyncpa %s26, 0
    loop: start=0, step=1, limit=6
    $region2: #{tpu_custom_call.1} parent=1 // loop_pre_header
      _
    $region3: #{tpu_custom_call.1} parent=1 // loop_header
      %s29 = sphi 0, %s33
      %p30 = scmp.ge.s32.totalorder %s29, 6
      %s36 = sphi 0, %s48
      %s37 = sphi 0, %s44
      %s38 = sphi 0, %s36
      %s39 = sphi 0, %s37
      %s40 = sphi 0, %s38
      %s41 = sphi 0, %s39
      %s51 = sphi 0, %s53
      %s54 = sphi 0, %s51
      %s55 = sphi 0, %s54
      %s71 = sphi 0, %s55
      %s77 = sphi 0, %s79
      %s80 = sphi 0, %s77
      %s81 = sphi 0, %s80
      %s97 = sphi 0, %s81
      %s103 = sphi 0, %s105
      %s106 = sphi 0, %s103
      %s107 = sphi 0, %s106
      %s123 = sphi 0, %s107
      %s129 = sphi 0, %s131
      %s132 = sphi 0, %s129
      %s133 = sphi 0, %s132
      %s149 = sphi 0, %s133
      %s155 = sphi 0, %s157
      %s158 = sphi 0, %s155
      %s159 = sphi 0, %s158
      %s175 = sphi 0, %s159
      %s181 = sphi 0, %s183
      %s184 = sphi 0, %s181
      %s185 = sphi 0, %s184
      %s201 = sphi 0, %s185
      %s207 = sphi 0, %s209
      %s210 = sphi 0, %s207
      %s211 = sphi 0, %s210
      %s227 = sphi 0, %s211
      %s233 = sphi 0, %s235
      %s236 = sphi 0, %s233
      %s237 = sphi 0, %s236
      %s253 = sphi 0, %s237
      %s259 = sphi 0, %s261
      %s262 = sphi 0, %s259
      %s263 = sphi 0, %s262
      %s279 = sphi 0, %s263
      %s285 = sphi 0, %s287
      %s288 = sphi 0, %s285
      %s289 = sphi 0, %s288
      %s305 = sphi 0, %s289
      %s311 = sphi 0, %s313
      %s314 = sphi 0, %s311
      %s315 = sphi 0, %s314
      %s331 = sphi 0, %s315
      %s337 = sphi 0, %s339
      %s340 = sphi 0, %s337
      %s341 = sphi 0, %s340
      %s357 = sphi 0, %s341
      %s363 = sphi 0, %s365
      %s366 = sphi 0, %s363
      %s367 = sphi 0, %s366
      %s383 = sphi 0, %s367
      %s389 = sphi 0, %s391
      %s392 = sphi 0, %s389
      %s393 = sphi 0, %s392
      %s409 = sphi 0, %s393
      %s415 = sphi 0, %s417
      %s418 = sphi 0, %s415
      %s419 = sphi 0, %s418
      %s435 = sphi 0, %s419
      %s441 = sphi 0, %s443
      %s444 = sphi 0, %s441
      %s445 = sphi 0, %s444
      %s461 = sphi 0, %s445
      %s467 = sphi 0, %s469
      %s470 = sphi 0, %s467
      %s471 = sphi 0, %s470
      %s487 = sphi 0, %s471
      %s493 = sphi 0, %s495
      %s496 = sphi 0, %s493
      %s497 = sphi 0, %s496
      %s513 = sphi 0, %s497
      %s517 = sphi 0, %s517
      %s519 = sphi 0, %s517
      %s520 = sphi 0, %s519
      %s534 = sphi 0, %s520
      %s538 = sphi 0, %s538
      %s540 = sphi 0, %s538
      %s541 = sphi 0, %s540
      %s555 = sphi 0, %s541
      %s561 = sphi 0, %s563
      %s564 = sphi 0, %s561
      %s565 = sphi 0, %s564
      %s581 = sphi 0, %s565
    $region4: #{tpu_custom_call.1} parent=1 // loop_header_branch
      %32 = sbr.rel (%p30) target = $region8
    $region5: #{tpu_custom_call.1} parent=1 // loop_body
      %s34 = ssub.s32 %s29, 1
      %s35 = ssub.s32 %s29, 2
      %s42 = sadd.s32 1, %s37
      %p43 = scmp.ge.s32.totalorder %s42, 2
      %s44 = scalar_select %p43, 0, %s42
      %s45 = sadd.s32 1, %s36
      %s46 = scalar_select %p43, %s45, %s36
      %p47 = scmp.ge.s32.totalorder %s46, 2
      %s48 = scalar_select %p47, 0, %s46
      %s49 = ssub.s32 %s36, %s48
      %p50 = scmp.eq.s32.totalorder %s49, 0
      %s52 = sadd.s32 %s51, 1
      %s53 = scalar_select %p50, %s51, %s52
      %p56 = pneg %p50
      %p57 = scmp.eq.s32.totalorder %s29, 3
      %p58 = por %p56, %p57
      %p59 = scmp.ne.s32.totalorder %s51, %s54
      %p60 = scmp.eq.s32.totalorder %s29, 0
      %p61 = por %p59, %p60
      %p62 = scmp.ne.s32.totalorder %s51, %s54
      %p63 = scmp.eq.s32.totalorder %s34, 3
      %p64 = por %p62, %p63
      %p65 = scmp.ne.s32.totalorder %s54, %s55
      %p66 = scmp.eq.s32.totalorder %s34, 0
      %p67 = por %p65, %p66
      %p68 = scmp.ne.s32.totalorder %s54, %s55
      %p69 = scmp.eq.s32.totalorder %s35, 3
      %p70 = por %p68, %p69
      %p72 = scmp.ne.s32.totalorder %s55, %s71
      %p73 = scmp.eq.s32.totalorder %s35, 0
      %p74 = por %p72, %p73
      %s75 = ssub.s32 %s36, %s48
      %p76 = scmp.eq.s32.totalorder %s75, 0
      %s78 = sadd.s32 %s77, 1
      %s79 = scalar_select %p76, %s77, %s78
      %p82 = pneg %p76
      %p83 = scmp.eq.s32.totalorder %s29, 3
      %p84 = por %p82, %p83
      %p85 = scmp.ne.s32.totalorder %s77, %s80
      %p86 = scmp.eq.s32.totalorder %s29, 0
      %p87 = por %p85, %p86
      %p88 = scmp.ne.s32.totalorder %s77, %s80
      %p89 = scmp.eq.s32.totalorder %s34, 3
      %p90 = por %p88, %p89
      %p91 = scmp.ne.s32.totalorder %s80, %s81
      %p92 = scmp.eq.s32.totalorder %s34, 0
      %p93 = por %p91, %p92
      %p94 = scmp.ne.s32.totalorder %s80, %s81
      %p95 = scmp.eq.s32.totalorder %s35, 3
      %p96 = por %p94, %p95
      %p98 = scmp.ne.s32.totalorder %s81, %s97
      %p99 = scmp.eq.s32.totalorder %s35, 0
      %p100 = por %p98, %p99
      %s101 = ssub.s32 %s37, %s44
      %p102 = scmp.eq.s32.totalorder %s101, 0
      %s104 = sadd.s32 %s103, 1
      %s105 = scalar_select %p102, %s103, %s104
      %p108 = pneg %p102
      %p109 = scmp.eq.s32.totalorder %s29, 3
      %p110 = por %p108, %p109
      %p111 = scmp.ne.s32.totalorder %s103, %s106
      %p112 = scmp.eq.s32.totalorder %s29, 0
      %p113 = por %p111, %p112
      %p114 = scmp.ne.s32.totalorder %s103, %s106
      %p115 = scmp.eq.s32.totalorder %s34, 3
      %p116 = por %p114, %p115
      %p117 = scmp.ne.s32.totalorder %s106, %s107
      %p118 = scmp.eq.s32.totalorder %s34, 0
      %p119 = por %p117, %p118
      %p120 = scmp.ne.s32.totalorder %s106, %s107
      %p121 = scmp.eq.s32.totalorder %s35, 3
      %p122 = por %p120, %p121
      %p124 = scmp.ne.s32.totalorder %s107, %s123
      %p125 = scmp.eq.s32.totalorder %s35, 0
      %p126 = por %p124, %p125
      %s127 = ssub.s32 %s37, %s44
      %p128 = scmp.eq.s32.totalorder %s127, 0
      %s130 = sadd.s32 %s129, 1
      %s131 = scalar_select %p128, %s129, %s130
      %p134 = pneg %p128
      %p135 = scmp.eq.s32.totalorder %s29, 3
      %p136 = por %p134, %p135
      %p137 = scmp.ne.s32.totalorder %s129, %s132
      %p138 = scmp.eq.s32.totalorder %s29, 0
      %p139 = por %p137, %p138
      %p140 = scmp.ne.s32.totalorder %s129, %s132
      %p141 = scmp.eq.s32.totalorder %s34, 3
      %p142 = por %p140, %p141
      %p143 = scmp.ne.s32.totalorder %s132, %s133
      %p144 = scmp.eq.s32.totalorder %s34, 0
      %p145 = por %p143, %p144
      %p146 = scmp.ne.s32.totalorder %s132, %s133
      %p147 = scmp.eq.s32.totalorder %s35, 3
      %p148 = por %p146, %p147
      %p150 = scmp.ne.s32.totalorder %s133, %s149
      %p151 = scmp.eq.s32.totalorder %s35, 0
      %p152 = por %p150, %p151
      %s153 = ssub.s32 %s37, %s44
      %p154 = scmp.eq.s32.totalorder %s153, 0
      %s156 = sadd.s32 %s155, 1
      %s157 = scalar_select %p154, %s155, %s156
      %p160 = pneg %p154
      %p161 = scmp.eq.s32.totalorder %s29, 3
      %p162 = por %p160, %p161
      %p163 = scmp.ne.s32.totalorder %s155, %s158
      %p164 = scmp.eq.s32.totalorder %s29, 0
      %p165 = por %p163, %p164
      %p166 = scmp.ne.s32.totalorder %s155, %s158
      %p167 = scmp.eq.s32.totalorder %s34, 3
      %p168 = por %p166, %p167
      %p169 = scmp.ne.s32.totalorder %s158, %s159
      %p170 = scmp.eq.s32.totalorder %s34, 0
      %p171 = por %p169, %p170
      %p172 = scmp.ne.s32.totalorder %s158, %s159
      %p173 = scmp.eq.s32.totalorder %s35, 3
      %p174 = por %p172, %p173
      %p176 = scmp.ne.s32.totalorder %s159, %s175
      %p177 = scmp.eq.s32.totalorder %s35, 0
      %p178 = por %p176, %p177
      %s179 = ssub.s32 %s37, %s44
      %p180 = scmp.eq.s32.totalorder %s179, 0
      %s182 = sadd.s32 %s181, 1
      %s183 = scalar_select %p180, %s181, %s182
      %p186 = pneg %p180
      %p187 = scmp.eq.s32.totalorder %s29, 3
      %p188 = por %p186, %p187
      %p189 = scmp.ne.s32.totalorder %s181, %s184
      %p190 = scmp.eq.s32.totalorder %s29, 0
      %p191 = por %p189, %p190
      %p192 = scmp.ne.s32.totalorder %s181, %s184
      %p193 = scmp.eq.s32.totalorder %s34, 3
      %p194 = por %p192, %p193
      %p195 = scmp.ne.s32.totalorder %s184, %s185
      %p196 = scmp.eq.s32.totalorder %s34, 0
      %p197 = por %p195, %p196
      %p198 = scmp.ne.s32.totalorder %s184, %s185
      %p199 = scmp.eq.s32.totalorder %s35, 3
      %p200 = por %p198, %p199
      %p202 = scmp.ne.s32.totalorder %s185, %s201
      %p203 = scmp.eq.s32.totalorder %s35, 0
      %p204 = por %p202, %p203
      %s205 = ssub.s32 %s37, %s44
      %p206 = scmp.eq.s32.totalorder %s205, 0
      %s208 = sadd.s32 %s207, 1
      %s209 = scalar_select %p206, %s207, %s208
      %p212 = pneg %p206
      %p213 = scmp.eq.s32.totalorder %s29, 3
      %p214 = por %p212, %p213
      %p215 = scmp.ne.s32.totalorder %s207, %s210
      %p216 = scmp.eq.s32.totalorder %s29, 0
      %p217 = por %p215, %p216
      %p218 = scmp.ne.s32.totalorder %s207, %s210
      %p219 = scmp.eq.s32.totalorder %s34, 3
      %p220 = por %p218, %p219
      %p221 = scmp.ne.s32.totalorder %s210, %s211
      %p222 = scmp.eq.s32.totalorder %s34, 0
      %p223 = por %p221, %p222
      %p224 = scmp.ne.s32.totalorder %s210, %s211
      %p225 = scmp.eq.s32.totalorder %s35, 3
      %p226 = por %p224, %p225
      %p228 = scmp.ne.s32.totalorder %s211, %s227
      %p229 = scmp.eq.s32.totalorder %s35, 0
      %p230 = por %p228, %p229
      %s231 = ssub.s32 %s37, %s44
      %p232 = scmp.eq.s32.totalorder %s231, 0
      %s234 = sadd.s32 %s233, 1
      %s235 = scalar_select %p232, %s233, %s234
      %p238 = pneg %p232
      %p239 = scmp.eq.s32.totalorder %s29, 3
      %p240 = por %p238, %p239
      %p241 = scmp.ne.s32.totalorder %s233, %s236
      %p242 = scmp.eq.s32.totalorder %s29, 0
      %p243 = por %p241, %p242
      %p244 = scmp.ne.s32.totalorder %s233, %s236
      %p245 = scmp.eq.s32.totalorder %s34, 3
      %p246 = por %p244, %p245
      %p247 = scmp.ne.s32.totalorder %s236, %s237
      %p248 = scmp.eq.s32.totalorder %s34, 0
      %p249 = por %p247, %p248
      %p250 = scmp.ne.s32.totalorder %s236, %s237
      %p251 = scmp.eq.s32.totalorder %s35, 3
      %p252 = por %p250, %p251
      %p254 = scmp.ne.s32.totalorder %s237, %s253
      %p255 = scmp.eq.s32.totalorder %s35, 0
      %p256 = por %p254, %p255
      %s257 = ssub.s32 %s37, %s44
      %p258 = scmp.eq.s32.totalorder %s257, 0
      %s260 = sadd.s32 %s259, 1
      %s261 = scalar_select %p258, %s259, %s260
      %p264 = pneg %p258
      %p265 = scmp.eq.s32.totalorder %s29, 3
      %p266 = por %p264, %p265
      %p267 = scmp.ne.s32.totalorder %s259, %s262
      %p268 = scmp.eq.s32.totalorder %s29, 0
      %p269 = por %p267, %p268
      %p270 = scmp.ne.s32.totalorder %s259, %s262
      %p271 = scmp.eq.s32.totalorder %s34, 3
      %p272 = por %p270, %p271
      %p273 = scmp.ne.s32.totalorder %s262, %s263
      %p274 = scmp.eq.s32.totalorder %s34, 0
      %p275 = por %p273, %p274
      %p276 = scmp.ne.s32.totalorder %s262, %s263
      %p277 = scmp.eq.s32.totalorder %s35, 3
      %p278 = por %p276, %p277
      %p280 = scmp.ne.s32.totalorder %s263, %s279
      %p281 = scmp.eq.s32.totalorder %s35, 0
      %p282 = por %p280, %p281
      %s283 = ssub.s32 %s37, %s44
      %p284 = scmp.eq.s32.totalorder %s283, 0
      %s286 = sadd.s32 %s285, 1
      %s287 = scalar_select %p284, %s285, %s286
      %p290 = pneg %p284
      %p291 = scmp.eq.s32.totalorder %s29, 3
      %p292 = por %p290, %p291
      %p293 = scmp.ne.s32.totalorder %s285, %s288
      %p294 = scmp.eq.s32.totalorder %s29, 0
      %p295 = por %p293, %p294
      %p296 = scmp.ne.s32.totalorder %s285, %s288
      %p297 = scmp.eq.s32.totalorder %s34, 3
      %p298 = por %p296, %p297
      %p299 = scmp.ne.s32.totalorder %s288, %s289
      %p300 = scmp.eq.s32.totalorder %s34, 0
      %p301 = por %p299, %p300
      %p302 = scmp.ne.s32.totalorder %s288, %s289
      %p303 = scmp.eq.s32.totalorder %s35, 3
      %p304 = por %p302, %p303
      %p306 = scmp.ne.s32.totalorder %s289, %s305
      %p307 = scmp.eq.s32.totalorder %s35, 0
      %p308 = por %p306, %p307
      %s309 = ssub.s32 %s37, %s44
      %p310 = scmp.eq.s32.totalorder %s309, 0
      %s312 = sadd.s32 %s311, 1
      %s313 = scalar_select %p310, %s311, %s312
      %p316 = pneg %p310
      %p317 = scmp.eq.s32.totalorder %s29, 3
      %p318 = por %p316, %p317
      %p319 = scmp.ne.s32.totalorder %s311, %s314
      %p320 = scmp.eq.s32.totalorder %s29, 0
      %p321 = por %p319, %p320
      %p322 = scmp.ne.s32.totalorder %s311, %s314
      %p323 = scmp.eq.s32.totalorder %s34, 3
      %p324 = por %p322, %p323
      %p325 = scmp.ne.s32.totalorder %s314, %s315
      %p326 = scmp.eq.s32.totalorder %s34, 0
      %p327 = por %p325, %p326
      %p328 = scmp.ne.s32.totalorder %s314, %s315
      %p329 = scmp.eq.s32.totalorder %s35, 3
      %p330 = por %p328, %p329
      %p332 = scmp.ne.s32.totalorder %s315, %s331
      %p333 = scmp.eq.s32.totalorder %s35, 0
      %p334 = por %p332, %p333
      %s335 = ssub.s32 %s37, %s44
      %p336 = scmp.eq.s32.totalorder %s335, 0
      %s338 = sadd.s32 %s337, 1
      %s339 = scalar_select %p336, %s337, %s338
      %p342 = pneg %p336
      %p343 = scmp.eq.s32.totalorder %s29, 3
      %p344 = por %p342, %p343
      %p345 = scmp.ne.s32.totalorder %s337, %s340
      %p346 = scmp.eq.s32.totalorder %s29, 0
      %p347 = por %p345, %p346
      %p348 = scmp.ne.s32.totalorder %s337, %s340
      %p349 = scmp.eq.s32.totalorder %s34, 3
      %p350 = por %p348, %p349
      %p351 = scmp.ne.s32.totalorder %s340, %s341
      %p352 = scmp.eq.s32.totalorder %s34, 0
      %p353 = por %p351, %p352
      %p354 = scmp.ne.s32.totalorder %s340, %s341
      %p355 = scmp.eq.s32.totalorder %s35, 3
      %p356 = por %p354, %p355
      %p358 = scmp.ne.s32.totalorder %s341, %s357
      %p359 = scmp.eq.s32.totalorder %s35, 0
      %p360 = por %p358, %p359
      %s361 = ssub.s32 %s37, %s44
      %p362 = scmp.eq.s32.totalorder %s361, 0
      %s364 = sadd.s32 %s363, 1
      %s365 = scalar_select %p362, %s363, %s364
      %p368 = pneg %p362
      %p369 = scmp.eq.s32.totalorder %s29, 3
      %p370 = por %p368, %p369
      %p371 = scmp.ne.s32.totalorder %s363, %s366
      %p372 = scmp.eq.s32.totalorder %s29, 0
      %p373 = por %p371, %p372
      %p374 = scmp.ne.s32.totalorder %s363, %s366
      %p375 = scmp.eq.s32.totalorder %s34, 3
      %p376 = por %p374, %p375
      %p377 = scmp.ne.s32.totalorder %s366, %s367
      %p378 = scmp.eq.s32.totalorder %s34, 0
      %p379 = por %p377, %p378
      %p380 = scmp.ne.s32.totalorder %s366, %s367
      %p381 = scmp.eq.s32.totalorder %s35, 3
      %p382 = por %p380, %p381
      %p384 = scmp.ne.s32.totalorder %s367, %s383
      %p385 = scmp.eq.s32.totalorder %s35, 0
      %p386 = por %p384, %p385
      %s387 = ssub.s32 %s37, %s44
      %p388 = scmp.eq.s32.totalorder %s387, 0
      %s390 = sadd.s32 %s389, 1
      %s391 = scalar_select %p388, %s389, %s390
      %p394 = pneg %p388
      %p395 = scmp.eq.s32.totalorder %s29, 3
      %p396 = por %p394, %p395
      %p397 = scmp.ne.s32.totalorder %s389, %s392
      %p398 = scmp.eq.s32.totalorder %s29, 0
      %p399 = por %p397, %p398
      %p400 = scmp.ne.s32.totalorder %s389, %s392
      %p401 = scmp.eq.s32.totalorder %s34, 3
      %p402 = por %p400, %p401
      %p403 = scmp.ne.s32.totalorder %s392, %s393
      %p404 = scmp.eq.s32.totalorder %s34, 0
      %p405 = por %p403, %p404
      %p406 = scmp.ne.s32.totalorder %s392, %s393
      %p407 = scmp.eq.s32.totalorder %s35, 3
      %p408 = por %p406, %p407
      %p410 = scmp.ne.s32.totalorder %s393, %s409
      %p411 = scmp.eq.s32.totalorder %s35, 0
      %p412 = por %p410, %p411
      %s413 = ssub.s32 %s37, %s44
      %p414 = scmp.eq.s32.totalorder %s413, 0
      %s416 = sadd.s32 %s415, 1
      %s417 = scalar_select %p414, %s415, %s416
      %p420 = pneg %p414
      %p421 = scmp.eq.s32.totalorder %s29, 3
      %p422 = por %p420, %p421
      %p423 = scmp.ne.s32.totalorder %s415, %s418
      %p424 = scmp.eq.s32.totalorder %s29, 0
      %p425 = por %p423, %p424
      %p426 = scmp.ne.s32.totalorder %s415, %s418
      %p427 = scmp.eq.s32.totalorder %s34, 3
      %p428 = por %p426, %p427
      %p429 = scmp.ne.s32.totalorder %s418, %s419
      %p430 = scmp.eq.s32.totalorder %s34, 0
      %p431 = por %p429, %p430
      %p432 = scmp.ne.s32.totalorder %s418, %s419
      %p433 = scmp.eq.s32.totalorder %s35, 3
      %p434 = por %p432, %p433
      %p436 = scmp.ne.s32.totalorder %s419, %s435
      %p437 = scmp.eq.s32.totalorder %s35, 0
      %p438 = por %p436, %p437
      %s439 = ssub.s32 %s37, %s44
      %p440 = scmp.eq.s32.totalorder %s439, 0
      %s442 = sadd.s32 %s441, 1
      %s443 = scalar_select %p440, %s441, %s442
      %p446 = pneg %p440
      %p447 = scmp.eq.s32.totalorder %s29, 3
      %p448 = por %p446, %p447
      %p449 = scmp.ne.s32.totalorder %s441, %s444
      %p450 = scmp.eq.s32.totalorder %s29, 0
      %p451 = por %p449, %p450
      %p452 = scmp.ne.s32.totalorder %s441, %s444
      %p453 = scmp.eq.s32.totalorder %s34, 3
      %p454 = por %p452, %p453
      %p455 = scmp.ne.s32.totalorder %s444, %s445
      %p456 = scmp.eq.s32.totalorder %s34, 0
      %p457 = por %p455, %p456
      %p458 = scmp.ne.s32.totalorder %s444, %s445
      %p459 = scmp.eq.s32.totalorder %s35, 3
      %p460 = por %p458, %p459
      %p462 = scmp.ne.s32.totalorder %s445, %s461
      %p463 = scmp.eq.s32.totalorder %s35, 0
      %p464 = por %p462, %p463
      %s465 = ssub.s32 %s37, %s44
      %p466 = scmp.eq.s32.totalorder %s465, 0
      %s468 = sadd.s32 %s467, 1
      %s469 = scalar_select %p466, %s467, %s468
      %p472 = pneg %p466
      %p473 = scmp.eq.s32.totalorder %s29, 3
      %p474 = por %p472, %p473
      %p475 = scmp.ne.s32.totalorder %s467, %s470
      %p476 = scmp.eq.s32.totalorder %s29, 0
      %p477 = por %p475, %p476
      %p478 = scmp.ne.s32.totalorder %s467, %s470
      %p479 = scmp.eq.s32.totalorder %s34, 3
      %p480 = por %p478, %p479
      %p481 = scmp.ne.s32.totalorder %s470, %s471
      %p482 = scmp.eq.s32.totalorder %s34, 0
      %p483 = por %p481, %p482
      %p484 = scmp.ne.s32.totalorder %s470, %s471
      %p485 = scmp.eq.s32.totalorder %s35, 3
      %p486 = por %p484, %p485
      %p488 = scmp.ne.s32.totalorder %s471, %s487
      %p489 = scmp.eq.s32.totalorder %s35, 0
      %p490 = por %p488, %p489
      %s491 = ssub.s32 %s37, %s44
      %p492 = scmp.eq.s32.totalorder %s491, 0
      %s494 = sadd.s32 %s493, 1
      %s495 = scalar_select %p492, %s493, %s494
      %p498 = pneg %p492
      %p499 = scmp.eq.s32.totalorder %s29, 3
      %p500 = por %p498, %p499
      %p501 = scmp.ne.s32.totalorder %s493, %s496
      %p502 = scmp.eq.s32.totalorder %s29, 0
      %p503 = por %p501, %p502
      %p504 = scmp.ne.s32.totalorder %s493, %s496
      %p505 = scmp.eq.s32.totalorder %s34, 3
      %p506 = por %p504, %p505
      %p507 = scmp.ne.s32.totalorder %s496, %s497
      %p508 = scmp.eq.s32.totalorder %s34, 0
      %p509 = por %p507, %p508
      %p510 = scmp.ne.s32.totalorder %s496, %s497
      %p511 = scmp.eq.s32.totalorder %s35, 3
      %p512 = por %p510, %p511
      %p514 = scmp.ne.s32.totalorder %s497, %s513
      %p515 = scmp.eq.s32.totalorder %s35, 0
      %p516 = por %p514, %p515
      %s518 = sadd.s32 %s517, 1
      %p521 = scmp.eq.s32.totalorder %s29, 3
      %p522 = scmp.ne.s32.totalorder %s517, %s519
      %p523 = scmp.eq.s32.totalorder %s29, 0
      %p524 = por %p522, %p523
      %p525 = scmp.ne.s32.totalorder %s517, %s519
      %p526 = scmp.eq.s32.totalorder %s34, 3
      %p527 = por %p525, %p526
      %p528 = scmp.ne.s32.totalorder %s519, %s520
      %p529 = scmp.eq.s32.totalorder %s34, 0
      %p530 = por %p528, %p529
      %p531 = scmp.ne.s32.totalorder %s519, %s520
      %p532 = scmp.eq.s32.totalorder %s35, 3
      %p533 = por %p531, %p532
      %p535 = scmp.ne.s32.totalorder %s520, %s534
      %p536 = scmp.eq.s32.totalorder %s35, 0
      %p537 = por %p535, %p536
      %s539 = sadd.s32 %s538, 1
      %p542 = scmp.eq.s32.totalorder %s29, 3
      %p543 = scmp.ne.s32.totalorder %s538, %s540
      %p544 = scmp.eq.s32.totalorder %s29, 0
      %p545 = por %p543, %p544
      %p546 = scmp.ne.s32.totalorder %s538, %s540
      %p547 = scmp.eq.s32.totalorder %s34, 3
      %p548 = por %p546, %p547
      %p549 = scmp.ne.s32.totalorder %s540, %s541
      %p550 = scmp.eq.s32.totalorder %s34, 0
      %p551 = por %p549, %p550
      %p552 = scmp.ne.s32.totalorder %s540, %s541
      %p553 = scmp.eq.s32.totalorder %s35, 3
      %p554 = por %p552, %p553
      %p556 = scmp.ne.s32.totalorder %s541, %s555
      %p557 = scmp.eq.s32.totalorder %s35, 0
      %p558 = por %p556, %p557
      %s559 = ssub.s32 %s36, %s48
      %p560 = scmp.eq.s32.totalorder %s559, 0
      %s562 = sadd.s32 %s561, 1
      %s563 = scalar_select %p560, %s561, %s562
      %p566 = pneg %p560
      %p567 = scmp.eq.s32.totalorder %s29, 3
      %p568 = por %p566, %p567
      %p569 = scmp.ne.s32.totalorder %s561, %s564
      %p570 = scmp.eq.s32.totalorder %s29, 0
      %p571 = por %p569, %p570
      %p572 = scmp.ne.s32.totalorder %s561, %s564
      %p573 = scmp.eq.s32.totalorder %s34, 3
      %p574 = por %p572, %p573
      %p575 = scmp.ne.s32.totalorder %s564, %s565
      %p576 = scmp.eq.s32.totalorder %s34, 0
      %p577 = por %p575, %p576
      %p578 = scmp.ne.s32.totalorder %s564, %s565
      %p579 = scmp.eq.s32.totalorder %s35, 3
      %p580 = por %p578, %p579
      %p582 = scmp.ne.s32.totalorder %s565, %s581
      %p583 = scmp.eq.s32.totalorder %s35, 0
      %p584 = por %p582, %p583
      %p585 = scmp.le.s32.totalorder 1, %s29
      %p586 = scmp.lt.s32.totalorder %s29, 5
      %p587 = pnand %p585, %p586
      %p588 = pneg %p587
      // Predicated region
      $region9: #{tpu_custom_call.1} parent=5 // pred_check
        _
      $region10: #{tpu_custom_call.1} parent=5 // pred_check_branch
        %590 = sbr.rel (%p587) target = $region12
      $region11: #{tpu_custom_call.1} parent=5 // pred_region
        %s591 = ssub.s32 %s29, 1
        // Predicated region
        $region13: #{tpu_custom_call.1} parent=11 // pred_check
          %p592 = pneg %p530
        $region14: #{tpu_custom_call.1} parent=11 // pred_check_branch
          %594 = sbr.rel (%p592) target = $region16
        $region15: #{tpu_custom_call.1} parent=11 // pred_region
          _
        $region16: #{tpu_custom_call.1} parent=11 // pred_fallthru
          _
        // Predicated region
        $region17: #{tpu_custom_call.1} parent=11 // pred_check
          %p595 = pneg %p551
        $region18: #{tpu_custom_call.1} parent=11 // pred_check_branch
          %597 = sbr.rel (%p595) target = $region20
        $region19: #{tpu_custom_call.1} parent=11 // pred_region
          _
        $region20: #{tpu_custom_call.1} parent=11 // pred_fallthru
          _
      $region12: #{tpu_custom_call.1} parent=5 // pred_fallthru
        _
      %p598 = scmp.lt.s32.totalorder %s29, 4
      // Predicated region
      $region21: #{tpu_custom_call.1} parent=5 // pred_check
        %p599 = pneg %p598
      $region22: #{tpu_custom_call.1} parent=5 // pred_check_branch
        %601 = sbr.rel (%p599) target = $region24
      $region23: #{tpu_custom_call.1} parent=5 // pred_region
        // Predicated region
        $region25: #{tpu_custom_call.1} parent=23 // pred_check
          %p602 = pneg %p61
        $region26: #{tpu_custom_call.1} parent=23 // pred_check_branch
          %604 = sbr.rel (%p602) target = $region28
        $region27: #{tpu_custom_call.1} parent=23 // pred_region
          %p605 = scmp.lt.s32.totalorder %s36, 1
          %s606 = scalar_select %p605, %s36, 1
          %s607 = smul.addr %s606, 8
          %s608 = scalar_lea.vmem %s0, %s607
        $region28: #{tpu_custom_call.1} parent=23 // pred_fallthru
          _
        // Predicated region
        $region29: #{tpu_custom_call.1} parent=23 // pred_check
          %p609 = pneg %p87
        $region30: #{tpu_custom_call.1} parent=23 // pred_check_branch
          %611 = sbr.rel (%p609) target = $region32
        $region31: #{tpu_custom_call.1} parent=23 // pred_region
          %p612 = scmp.lt.s32.totalorder %s36, 1
          %s613 = scalar_select %p612, %s36, 1
          %s614 = scalar_lea.vmem %s1, %s613
        $region32: #{tpu_custom_call.1} parent=23 // pred_fallthru
          _
        // Predicated region
        $region33: #{tpu_custom_call.1} parent=23 // pred_check
          %p615 = pneg %p113
        $region34: #{tpu_custom_call.1} parent=23 // pred_check_branch
          %617 = sbr.rel (%p615) target = $region36
        $region35: #{tpu_custom_call.1} parent=23 // pred_region
          %p618 = scmp.lt.s32.totalorder %s37, 1
          %s619 = scalar_select %p618, %s37, 1
          %s620 = smul.addr %s619, 16
          %s621 = smul.addr %s620, 4
          %s622 = scalar_lea.vmem %s2, %s621
        $region36: #{tpu_custom_call.1} parent=23 // pred_fallthru
          _
        // Predicated region
        $region37: #{tpu_custom_call.1} parent=23 // pred_check
          %p623 = pneg %p139
        $region38: #{tpu_custom_call.1} parent=23 // pred_check_branch
          %625 = sbr.rel (%p623) target = $region40
        $region39: #{tpu_custom_call.1} parent=23 // pred_region
          %p626 = scmp.lt.s32.totalorder %s37, 1
          %s627 = scalar_select %p626, %s37, 1
          %s628 = smul.addr %s627, 4
          %s629 = scalar_lea.vmem %s3, %s628
        $region40: #{tpu_custom_call.1} parent=23 // pred_fallthru
          _
        // Predicated region
        $region41: #{tpu_custom_call.1} parent=23 // pred_check
          %p630 = pneg %p165
        $region42: #{tpu_custom_call.1} parent=23 // pred_check_branch
          %632 = sbr.rel (%p630) target = $region44
        $region43: #{tpu_custom_call.1} parent=23 // pred_region
          %p633 = scmp.lt.s32.totalorder %s37, 1
          %s634 = scalar_select %p633, %s37, 1
          %s635 = smul.addr %s634, 16
          %s636 = smul.addr %s635, 4
          %s637 = scalar_lea.vmem %s4, %s636
        $region44: #{tpu_custom_call.1} parent=23 // pred_fallthru
          _
        // Predicated region
        $region45: #{tpu_custom_call.1} parent=23 // pred_check
          %p638 = pneg %p191
        $region46: #{tpu_custom_call.1} parent=23 // pred_check_branch
          %640 = sbr.rel (%p638) target = $region48
        $region47: #{tpu_custom_call.1} parent=23 // pred_region
          %p641 = scmp.lt.s32.totalorder %s37, 1
          %s642 = scalar_select %p641, %s37, 1
          %s643 = smul.addr %s642, 4
          %s644 = scalar_lea.vmem %s5, %s643
        $region48: #{tpu_custom_call.1} parent=23 // pred_fallthru
          _
        // Predicated region
        $region49: #{tpu_custom_call.1} parent=23 // pred_check
          %p645 = pneg %p217
        $region50: #{tpu_custom_call.1} parent=23 // pred_check_branch
          %647 = sbr.rel (%p645) target = $region52
        $region51: #{tpu_custom_call.1} parent=23 // pred_region
          %p648 = scmp.lt.s32.totalorder %s37, 1
          %s649 = scalar_select %p648, %s37, 1
          %s650 = smul.addr %s649, 16
          %s651 = smul.addr %s650, 4
          %s652 = scalar_lea.vmem %s6, %s651
        $region52: #{tpu_custom_call.1} parent=23 // pred_fallthru
          _
        // Predicated region
        $region53: #{tpu_custom_call.1} parent=23 // pred_check
          %p653 = pneg %p243
        $region54: #{tpu_custom_call.1} parent=23 // pred_check_branch
          %655 = sbr.rel (%p653) target = $region56
        $region55: #{tpu_custom_call.1} parent=23 // pred_region
          %p656 = scmp.lt.s32.totalorder %s37, 1
          %s657 = scalar_select %p656, %s37, 1
          %s658 = smul.addr %s657, 4
          %s659 = scalar_lea.vmem %s7, %s658
        $region56: #{tpu_custom_call.1} parent=23 // pred_fallthru
          _
        // Predicated region
        $region57: #{tpu_custom_call.1} parent=23 // pred_check
          %p660 = pneg %p269
        $region58: #{tpu_custom_call.1} parent=23 // pred_check_branch
          %662 = sbr.rel (%p660) target = $region60
        $region59: #{tpu_custom_call.1} parent=23 // pred_region
          %p663 = scmp.lt.s32.totalorder %s37, 1
          %s664 = scalar_select %p663, %s37, 1
          %s665 = smul.addr %s664, 4
          %s666 = smul.addr %s665, 4
          %s667 = scalar_lea.vmem %s8, %s666
        $region60: #{tpu_custom_call.1} parent=23 // pred_fallthru
          _
        // Predicated region
        $region61: #{tpu_custom_call.1} parent=23 // pred_check
          %p668 = pneg %p295
        $region62: #{tpu_custom_call.1} parent=23 // pred_check_branch
          %670 = sbr.rel (%p668) target = $region64
        $region63: #{tpu_custom_call.1} parent=23 // pred_region
          %p671 = scmp.lt.s32.totalorder %s37, 1
          %s672 = scalar_select %p671, %s37, 1
          %s673 = scalar_lea.vmem %s9, %s672
        $region64: #{tpu_custom_call.1} parent=23 // pred_fallthru
          _
        // Predicated region
        $region65: #{tpu_custom_call.1} parent=23 // pred_check
          %p674 = pneg %p321
        $region66: #{tpu_custom_call.1} parent=23 // pred_check_branch
          %676 = sbr.rel (%p674) target = $region68
        $region67: #{tpu_custom_call.1} parent=23 // pred_region
          %p677 = scmp.lt.s32.totalorder %s37, 1
          %s678 = scalar_select %p677, %s37, 1
          %s679 = scalar_lea.vmem %s10, %s678
        $region68: #{tpu_custom_call.1} parent=23 // pred_fallthru
          _
        // Predicated region
        $region69: #{tpu_custom_call.1} parent=23 // pred_check
          %p680 = pneg %p347
        $region70: #{tpu_custom_call.1} parent=23 // pred_check_branch
          %682 = sbr.rel (%p680) target = $region72
        $region71: #{tpu_custom_call.1} parent=23 // pred_region
          %p683 = scmp.lt.s32.totalorder %s37, 1
          %s684 = scalar_select %p683, %s37, 1
          %s685 = scalar_lea.vmem %s11, %s684
        $region72: #{tpu_custom_call.1} parent=23 // pred_fallthru
          _
        // Predicated region
        $region73: #{tpu_custom_call.1} parent=23 // pred_check
          %p686 = pneg %p373
        $region74: #{tpu_custom_call.1} parent=23 // pred_check_branch
          %688 = sbr.rel (%p686) target = $region76
        $region75: #{tpu_custom_call.1} parent=23 // pred_region
          %p689 = scmp.lt.s32.totalorder %s37, 1
          %s690 = scalar_select %p689, %s37, 1
          %s691 = smul.addr %s690, 4
          %s692 = smul.addr %s691, 4
          %s693 = scalar_lea.vmem %s12, %s692
        $region76: #{tpu_custom_call.1} parent=23 // pred_fallthru
          _
        // Predicated region
        $region77: #{tpu_custom_call.1} parent=23 // pred_check
          %p694 = pneg %p399
        $region78: #{tpu_custom_call.1} parent=23 // pred_check_branch
          %696 = sbr.rel (%p694) target = $region80
        $region79: #{tpu_custom_call.1} parent=23 // pred_region
          %p697 = scmp.lt.s32.totalorder %s37, 1
          %s698 = scalar_select %p697, %s37, 1
          %s699 = scalar_lea.vmem %s13, %s698
        $region80: #{tpu_custom_call.1} parent=23 // pred_fallthru
          _
        // Predicated region
        $region81: #{tpu_custom_call.1} parent=23 // pred_check
          %p700 = pneg %p425
        $region82: #{tpu_custom_call.1} parent=23 // pred_check_branch
          %702 = sbr.rel (%p700) target = $region84
        $region83: #{tpu_custom_call.1} parent=23 // pred_region
          %p703 = scmp.lt.s32.totalorder %s37, 1
          %s704 = scalar_select %p703, %s37, 1
          %s705 = smul.addr %s704, 8
          %s706 = smul.addr %s705, 4
          %s707 = scalar_lea.vmem %s14, %s706
        $region84: #{tpu_custom_call.1} parent=23 // pred_fallthru
          _
        // Predicated region
        $region85: #{tpu_custom_call.1} parent=23 // pred_check
          %p708 = pneg %p451
        $region86: #{tpu_custom_call.1} parent=23 // pred_check_branch
          %710 = sbr.rel (%p708) target = $region88
        $region87: #{tpu_custom_call.1} parent=23 // pred_region
          %p711 = scmp.lt.s32.totalorder %s37, 1
          %s712 = scalar_select %p711, %s37, 1
          %s713 = scalar_lea.vmem %s15, %s712
        $region88: #{tpu_custom_call.1} parent=23 // pred_fallthru
          _
        // Predicated region
        $region89: #{tpu_custom_call.1} parent=23 // pred_check
          %p714 = pneg %p477
        $region90: #{tpu_custom_call.1} parent=23 // pred_check_branch
          %716 = sbr.rel (%p714) target = $region92
        $region91: #{tpu_custom_call.1} parent=23 // pred_region
          %p717 = scmp.lt.s32.totalorder %s37, 1
          %s718 = scalar_select %p717, %s37, 1
          %s719 = scalar_lea.vmem %s16, %s718
        $region92: #{tpu_custom_call.1} parent=23 // pred_fallthru
          _
        // Predicated region
        $region93: #{tpu_custom_call.1} parent=23 // pred_check
          %p720 = pneg %p503
        $region94: #{tpu_custom_call.1} parent=23 // pred_check_branch
          %722 = sbr.rel (%p720) target = $region96
        $region95: #{tpu_custom_call.1} parent=23 // pred_region
          %p723 = scmp.lt.s32.totalorder %s37, 1
          %s724 = scalar_select %p723, %s37, 1
          %s725 = scalar_lea.vmem %s17, %s724
        $region96: #{tpu_custom_call.1} parent=23 // pred_fallthru
          _
      $region24: #{tpu_custom_call.1} parent=5 // pred_fallthru
        _
      %p726 = scmp.le.s32.totalorder 1, %s29
      %p727 = scmp.lt.s32.totalorder %s29, 5
      %p728 = pnand %p726, %p727
      %p729 = pneg %p728
      // Predicated region
      $region97: #{tpu_custom_call.1} parent=5 // pred_check
        _
      $region98: #{tpu_custom_call.1} parent=5 // pred_check_branch
        %731 = sbr.rel (%p728) target = $region100
      $region99: #{tpu_custom_call.1} parent=5 // pred_region
        %s732 = ssub.s32 %s29, 1
        %p733 = scmp.lt.s32.totalorder %s38, 1
        %s734 = scalar_select %p733, %s38, 1
        %s735 = smul.addr %s734, 8
        %s736 = scalar_lea.vmem %s0, %s735
        %p737 = pneg %p67
        %p738 = pneg %p64
        %p739 = scmp.lt.s32.totalorder %s38, 1
        %s740 = scalar_select %p739, %s38, 1
        %s741 = scalar_lea.vmem %s1, %s740
        %p742 = pneg %p93
        %p743 = pneg %p90
        %p744 = scmp.lt.s32.totalorder %s39, 1
        %s745 = scalar_select %p744, %s39, 1
        %s746 = smul.addr %s745, 16
        %s747 = smul.addr %s746, 4
        %s748 = scalar_lea.vmem %s2, %s747
        %p749 = pneg %p119
        %p750 = pneg %p116
        %p751 = scmp.lt.s32.totalorder %s39, 1
        %s752 = scalar_select %p751, %s39, 1
        %s753 = smul.addr %s752, 4
        %s754 = scalar_lea.vmem %s3, %s753
        %p755 = pneg %p145
        %p756 = pneg %p142
        %p757 = scmp.lt.s32.totalorder %s39, 1
        %s758 = scalar_select %p757, %s39, 1
        %s759 = smul.addr %s758, 16
        %s760 = smul.addr %s759, 4
        %s761 = scalar_lea.vmem %s4, %s760
        %p762 = pneg %p171
        %p763 = pneg %p168
        %p764 = scmp.lt.s32.totalorder %s39, 1
        %s765 = scalar_select %p764, %s39, 1
        %s766 = smul.addr %s765, 4
        %s767 = scalar_lea.vmem %s5, %s766
        %p768 = pneg %p197
        %p769 = pneg %p194
        %p770 = scmp.lt.s32.totalorder %s39, 1
        %s771 = scalar_select %p770, %s39, 1
        %s772 = smul.addr %s771, 16
        %s773 = smul.addr %s772, 4
        %s774 = scalar_lea.vmem %s6, %s773
        %p775 = pneg %p223
        %p776 = pneg %p220
        %p777 = scmp.lt.s32.totalorder %s39, 1
        %s778 = scalar_select %p777, %s39, 1
        %s779 = smul.addr %s778, 4
        %s780 = scalar_lea.vmem %s7, %s779
        %p781 = pneg %p249
        %p782 = pneg %p246
        %p783 = scmp.lt.s32.totalorder %s39, 1
        %s784 = scalar_select %p783, %s39, 1
        %s785 = smul.addr %s784, 4
        %s786 = smul.addr %s785, 4
        %s787 = scalar_lea.vmem %s8, %s786
        %p788 = pneg %p275
        %p789 = pneg %p272
        %p790 = scmp.lt.s32.totalorder %s39, 1
        %s791 = scalar_select %p790, %s39, 1
        %s792 = scalar_lea.vmem %s9, %s791
        %p793 = pneg %p301
        %p794 = pneg %p298
        %p795 = scmp.lt.s32.totalorder %s39, 1
        %s796 = scalar_select %p795, %s39, 1
        %s797 = scalar_lea.vmem %s10, %s796
        %p798 = pneg %p327
        %p799 = pneg %p324
        %p800 = scmp.lt.s32.totalorder %s39, 1
        %s801 = scalar_select %p800, %s39, 1
        %s802 = scalar_lea.vmem %s11, %s801
        %p803 = pneg %p353
        %p804 = pneg %p350
        %p805 = scmp.lt.s32.totalorder %s39, 1
        %s806 = scalar_select %p805, %s39, 1
        %s807 = smul.addr %s806, 4
        %s808 = smul.addr %s807, 4
        %s809 = scalar_lea.vmem %s12, %s808
        %p810 = pneg %p379
        %p811 = pneg %p376
        %p812 = scmp.lt.s32.totalorder %s39, 1
        %s813 = scalar_select %p812, %s39, 1
        %s814 = scalar_lea.vmem %s13, %s813
        %p815 = pneg %p405
        %p816 = pneg %p402
        %p817 = scmp.lt.s32.totalorder %s39, 1
        %s818 = scalar_select %p817, %s39, 1
        %s819 = smul.addr %s818, 8
        %s820 = smul.addr %s819, 4
        %s821 = scalar_lea.vmem %s14, %s820
        %p822 = pneg %p431
        %p823 = pneg %p428
        %p824 = scmp.lt.s32.totalorder %s39, 1
        %s825 = scalar_select %p824, %s39, 1
        %s826 = scalar_lea.vmem %s15, %s825
        %p827 = pneg %p457
        %p828 = pneg %p454
        %p829 = scmp.lt.s32.totalorder %s39, 1
        %s830 = scalar_select %p829, %s39, 1
        %s831 = scalar_lea.vmem %s16, %s830
        %p832 = pneg %p483
        %p833 = pneg %p480
        %p834 = scmp.lt.s32.totalorder %s39, 1
        %s835 = scalar_select %p834, %s39, 1
        %s836 = scalar_lea.vmem %s17, %s835
        %p837 = pneg %p509
        %p838 = pneg %p506
        %p839 = pneg %p530
        %p840 = pneg %p527
        %p841 = pneg %p551
        %p842 = pneg %p548
        %p843 = pneg %p577
        %p844 = pneg %p574
        %s845 = sand.u32 %s564, 1
        %s846 = scalar_lea.sflag [#allocation4], %s845
        %s847 = sand.u32 %s564, 1
        %s848 = smul.addr %s847, 2
        %s849 = scalar_lea.vmem [#allocation3], %s848
        %p850 = scmp.lt.s32.totalorder %s38, 1
        %s851 = scalar_select %p850, %s38, 1
        %s852 = smul.addr %s851, 8
        %s853 = scalar_lea.vmem %s0, %s852
        %p854 = scmp.lt.s32.totalorder %s38, 1
        %s855 = scalar_select %p854, %s38, 1
        %s856 = scalar_lea.vmem %s1, %s855
        %p857 = scmp.lt.s32.totalorder %s39, 1
        %s858 = scalar_select %p857, %s39, 1
        %s859 = smul.addr %s858, 16
        %s860 = smul.addr %s859, 4
        %s861 = scalar_lea.vmem %s2, %s860
        %p862 = scmp.lt.s32.totalorder %s39, 1
        %s863 = scalar_select %p862, %s39, 1
        %s864 = smul.addr %s863, 4
        %s865 = scalar_lea.vmem %s3, %s864
        %p866 = scmp.lt.s32.totalorder %s39, 1
        %s867 = scalar_select %p866, %s39, 1
        %s868 = smul.addr %s867, 16
        %s869 = smul.addr %s868, 4
        %s870 = scalar_lea.vmem %s4, %s869
        %p871 = scmp.lt.s32.totalorder %s39, 1
        %s872 = scalar_select %p871, %s39, 1
        %s873 = smul.addr %s872, 4
        %s874 = scalar_lea.vmem %s5, %s873
        %p875 = scmp.lt.s32.totalorder %s39, 1
        %s876 = scalar_select %p875, %s39, 1
        %s877 = smul.addr %s876, 16
        %s878 = smul.addr %s877, 4
        %s879 = scalar_lea.vmem %s6, %s878
        %p880 = scmp.lt.s32.totalorder %s39, 1
        %s881 = scalar_select %p880, %s39, 1
        %s882 = smul.addr %s881, 4
        %s883 = scalar_lea.vmem %s7, %s882
        %p884 = scmp.lt.s32.totalorder %s39, 1
        %s885 = scalar_select %p884, %s39, 1
        %s886 = smul.addr %s885, 4
        %s887 = smul.addr %s886, 4
        %s888 = scalar_lea.vmem %s8, %s887
        %p889 = scmp.lt.s32.totalorder %s39, 1
        %s890 = scalar_select %p889, %s39, 1
        %s891 = scalar_lea.vmem %s9, %s890
        %p892 = scmp.lt.s32.totalorder %s39, 1
        %s893 = scalar_select %p892, %s39, 1
        %s894 = scalar_lea.vmem %s10, %s893
        %p895 = scmp.lt.s32.totalorder %s39, 1
        %s896 = scalar_select %p895, %s39, 1
        %s897 = scalar_lea.vmem %s11, %s896
        %p898 = scmp.lt.s32.totalorder %s39, 1
        %s899 = scalar_select %p898, %s39, 1
        %s900 = smul.addr %s899, 4
        %s901 = smul.addr %s900, 4
        %s902 = scalar_lea.vmem %s12, %s901
        %p903 = scmp.lt.s32.totalorder %s39, 1
        %s904 = scalar_select %p903, %s39, 1
        %s905 = scalar_lea.vmem %s13, %s904
        %p906 = scmp.lt.s32.totalorder %s39, 1
        %s907 = scalar_select %p906, %s39, 1
        %s908 = smul.addr %s907, 8
        %s909 = smul.addr %s908, 4
        %s910 = scalar_lea.vmem %s14, %s909
        %p911 = scmp.lt.s32.totalorder %s39, 1
        %s912 = scalar_select %p911, %s39, 1
        %s913 = scalar_lea.vmem %s15, %s912
        %p914 = scmp.lt.s32.totalorder %s39, 1
        %s915 = scalar_select %p914, %s39, 1
        %s916 = scalar_lea.vmem %s16, %s915
        %p917 = scmp.lt.s32.totalorder %s39, 1
        %s918 = scalar_select %p917, %s39, 1
        %s919 = scalar_lea.vmem %s17, %s918
        %p921 = scmp.eq.s32.totalorder %s39, 0
        // Predicated region
        $region101: #{tpu_custom_call.1} parent=99 // pred_check
          %p922 = pneg %p921
        $region102: #{tpu_custom_call.1} parent=99 // pred_check_branch
          %924 = sbr.rel (%p922) target = $region104
        $region103: #{tpu_custom_call.1} parent=99 // pred_region
          %v925 = vld [vmem:[%s853] sm:$0xff]
          %vm926 = vcmask 261120
          %927 = vst.msk [vmem:[#allocation2] sm:$0xff] %vm926, %v925
        $region104: #{tpu_custom_call.1} parent=99 // pred_fallthru
          _
        %v928 = vld [vmem:[#allocation2] sm:$0xff]
        %v929 = vld [vmem:[%s856] sm:$0x1]
        %vm930 = vcmp.gt.s32.totalorder %v929, 0
        %v931 = vsel %vm930, 0.0, -1e+09
        %v932 = vpack.c.bf16 %v928, %v928
        %v933 = vld [vmem:[%s861] sm:$0xf]
        %v934 = vld [vmem:[%s861 + $0x4] sm:$0xf]
        %v935 = vld [vmem:[%s861 + $0x8] sm:$0xf]
        %v936 = vld [vmem:[%s861 + $0xc] sm:$0xf]
        %v937 = vld [vmem:[%s861 + $0x10] sm:$0xf]
        %v938 = vld [vmem:[%s861 + $0x14] sm:$0xf]
        %v939 = vld [vmem:[%s861 + $0x18] sm:$0xf]
        %v940 = vld [vmem:[%s861 + $0x1c] sm:$0xf]
        %v941 = vld [vmem:[%s861 + $0x20] sm:$0xf]
        %v942 = vld [vmem:[%s861 + $0x24] sm:$0xf]
        %v943 = vld [vmem:[%s861 + $0x28] sm:$0xf]
        %v944 = vld [vmem:[%s861 + $0x2c] sm:$0xf]
        %v945 = vld [vmem:[%s861 + $0x30] sm:$0xf]
        %v946 = vld [vmem:[%s861 + $0x34] sm:$0xf]
        %v947 = vld [vmem:[%s861 + $0x38] sm:$0xf]
        %v948 = vld [vmem:[%s861 + $0x3c] sm:$0xf]
        %v949 = vld [vmem:[%s865] sm:$0x1]
        %v950 = vld [vmem:[%s865 + $0x1] sm:$0x1]
        %v951 = vld [vmem:[%s865 + $0x2] sm:$0x1]
        %v952 = vld [vmem:[%s865 + $0x3] sm:$0x1]
        %v957 = vlaneseq
        %v958 = vshrl.u32 %v957, 7
        %v959 = vsub.s32 0, %v958
        %v960 = vrot.slane %v949, %v959
        %v961 = vlaneseq
        %v962 = vshrl.u32 %v961, 7
        %v963 = vsub.s32 0, %v962
        %v964 = vrot.slane %v950, %v963
        %v965 = vlaneseq
        %v966 = vshrl.u32 %v965, 7
        %v967 = vsub.s32 0, %v966
        %v968 = vrot.slane %v951, %v967
        %v969 = vlaneseq
        %v970 = vshrl.u32 %v969, 7
        %v971 = vsub.s32 0, %v970
        %v972 = vrot.slane %v952, %v971
        %v981 = vunpack.c.l.b16 %v933
        %v982 = vunpack.c.l.b16 %v934
        %v983 = vunpack.c.l.b16 %v935
        %v984 = vunpack.c.l.b16 %v936
        %v985 = vpack.c.b16 %v982, %v981
        %v986 = vpack.c.b16 %v984, %v983
        %vm989 = vcmask 261120
        %v991 = vsel %vm989, %v932, 0
        %993 = vmatprep.subr.bf16.mxu0 0
        %994 = vmatpush1.bf16.msra.mxu0 0
        %995 = vmatprep.subr.bf16.mxu0 0
        %996 = vmatpush1.bf16.msra.mxu0 0
        %997 = vmatprep.subr.bf16.mxu0 0
        %998 = vmatpush1.bf16.msra.mxu0 0
        %999 = vmatprep.subr.bf16.mxu0 0
        %1000 = vmatpush1.bf16.msra.mxu0 0
        %1001 = vmatprep.subr.bf16.mxu0 0
        %1002 = vmatpush1.bf16.msra.mxu0 0
        %1003 = vmatprep.subr.bf16.mxu0 0
        %1004 = vmatpush1.bf16.msra.mxu0 0
        %1005 = vmatprep.subr.bf16.mxu0 0
        %1006 = vmatpush1.bf16.msra.mxu0 %v986
        %1007 = vmatprep.subr.bf16.mxu0 0
        %1008 = vmatpush1.bf16.msra.mxu0 %v985
        %1009 = vmatprep.subr.bf16.mxu0 0
        %1010 = vmatpush2.bf16.msra.mxu0 0
        %1011 = vmatprep.subr.bf16.mxu0 0
        %1012 = vmatpush2.bf16.msra.mxu0 0
        %1013 = vmatprep.subr.bf16.mxu0 0
        %1014 = vmatpush2.bf16.msra.mxu0 0
        %1015 = vmatprep.subr.bf16.mxu0 0
        %1016 = vmatpush2.bf16.msra.mxu0 0
        %1017 = vmatprep.subr.bf16.mxu0 0
        %1018 = vmatpush2.bf16.msra.mxu0 0
        %1019 = vmatprep.subr.bf16.mxu0 0
        %1020 = vmatpush2.bf16.msra.mxu0 0
        %1021 = vmatprep.subr.bf16.mxu0 0
        %1022 = vmatpush2.bf16.msra.mxu0 0
        %1023 = vmatprep.subr.bf16.mxu0 0
        %1024 = vmatpush2.bf16.msra.mxu0 0
        %1025 = vmatprep.mubr.bf16.mxu0 0
        %1026 = vmatmul.mubr.bf16.gmra.mxu0 %v991
        %v1027 = vpop.f32.mrf.mxu0
        %v1028 = vadd.f32 %v960, %v1027
        %v1029 = vpop.f32.mrf.mxu0
        %v1030 = vpop.f32.mrf.mxu0
        %v1031 = vpop.f32.mrf.mxu0
        %1032 = vdwg.mxu0
        %v1037 = vunpack.c.l.b16 %v937
        %v1038 = vunpack.c.l.b16 %v938
        %v1039 = vunpack.c.l.b16 %v939
        %v1040 = vunpack.c.l.b16 %v940
        %v1041 = vpack.c.b16 %v1038, %v1037
        %v1042 = vpack.c.b16 %v1040, %v1039
        %1045 = vmatprep.subr.bf16.mxu0 0
        %1046 = vmatpush1.bf16.msra.mxu0 0
        %1047 = vmatprep.subr.bf16.mxu0 0
        %1048 = vmatpush1.bf16.msra.mxu0 0
        %1049 = vmatprep.subr.bf16.mxu0 0
        %1050 = vmatpush1.bf16.msra.mxu0 0
        %1051 = vmatprep.subr.bf16.mxu0 0
        %1052 = vmatpush1.bf16.msra.mxu0 0
        %1053 = vmatprep.subr.bf16.mxu0 0
        %1054 = vmatpush1.bf16.msra.mxu0 0
        %1055 = vmatprep.subr.bf16.mxu0 0
        %1056 = vmatpush1.bf16.msra.mxu0 0
        %1057 = vmatprep.subr.bf16.mxu0 0
        %1058 = vmatpush1.bf16.msra.mxu0 %v1042
        %1059 = vmatprep.subr.bf16.mxu0 0
        %1060 = vmatpush1.bf16.msra.mxu0 %v1041
        %1061 = vmatprep.subr.bf16.mxu0 0
        %1062 = vmatpush2.bf16.msra.mxu0 0
        %1063 = vmatprep.subr.bf16.mxu0 0
        %1064 = vmatpush2.bf16.msra.mxu0 0
        %1065 = vmatprep.subr.bf16.mxu0 0
        %1066 = vmatpush2.bf16.msra.mxu0 0
        %1067 = vmatprep.subr.bf16.mxu0 0
        %1068 = vmatpush2.bf16.msra.mxu0 0
        %1069 = vmatprep.subr.bf16.mxu0 0
        %1070 = vmatpush2.bf16.msra.mxu0 0
        %1071 = vmatprep.subr.bf16.mxu0 0
        %1072 = vmatpush2.bf16.msra.mxu0 0
        %1073 = vmatprep.subr.bf16.mxu0 0
        %1074 = vmatpush2.bf16.msra.mxu0 0
        %1075 = vmatprep.subr.bf16.mxu0 0
        %1076 = vmatpush2.bf16.msra.mxu0 0
        %1077 = vmatprep.mubr.bf16.mxu0 0
        %1078 = vmatmul.mubr.bf16.gmra.mxu0 %v991
        %v1079 = vpop.f32.mrf.mxu0
        %v1080 = vadd.f32 %v964, %v1079
        %v1081 = vpop.f32.mrf.mxu0
        %v1082 = vpop.f32.mrf.mxu0
        %v1083 = vpop.f32.mrf.mxu0
        %1084 = vdwg.mxu0
        %v1089 = vunpack.c.l.b16 %v941
        %v1090 = vunpack.c.l.b16 %v942
        %v1091 = vunpack.c.l.b16 %v943
        %v1092 = vunpack.c.l.b16 %v944
        %v1093 = vpack.c.b16 %v1090, %v1089
        %v1094 = vpack.c.b16 %v1092, %v1091
        %1097 = vmatprep.subr.bf16.mxu0 0
        %1098 = vmatpush1.bf16.msra.mxu0 0
        %1099 = vmatprep.subr.bf16.mxu0 0
        %1100 = vmatpush1.bf16.msra.mxu0 0
        %1101 = vmatprep.subr.bf16.mxu0 0
        %1102 = vmatpush1.bf16.msra.mxu0 0
        %1103 = vmatprep.subr.bf16.mxu0 0
        %1104 = vmatpush1.bf16.msra.mxu0 0
        %1105 = vmatprep.subr.bf16.mxu0 0
        %1106 = vmatpush1.bf16.msra.mxu0 0
        %1107 = vmatprep.subr.bf16.mxu0 0
        %1108 = vmatpush1.bf16.msra.mxu0 0
        %1109 = vmatprep.subr.bf16.mxu0 0
        %1110 = vmatpush1.bf16.msra.mxu0 %v1094
        %1111 = vmatprep.subr.bf16.mxu0 0
        %1112 = vmatpush1.bf16.msra.mxu0 %v1093
        %1113 = vmatprep.subr.bf16.mxu0 0
        %1114 = vmatpush2.bf16.msra.mxu0 0
        %1115 = vmatprep.subr.bf16.mxu0 0
        %1116 = vmatpush2.bf16.msra.mxu0 0
        %1117 = vmatprep.subr.bf16.mxu0 0
        %1118 = vmatpush2.bf16.msra.mxu0 0
        %1119 = vmatprep.subr.bf16.mxu0 0
        %1120 = vmatpush2.bf16.msra.mxu0 0
        %1121 = vmatprep.subr.bf16.mxu0 0
        %1122 = vmatpush2.bf16.msra.mxu0 0
        %1123 = vmatprep.subr.bf16.mxu0 0
        %1124 = vmatpush2.bf16.msra.mxu0 0
        %1125 = vmatprep.subr.bf16.mxu0 0
        %1126 = vmatpush2.bf16.msra.mxu0 0
        %1127 = vmatprep.subr.bf16.mxu0 0
        %1128 = vmatpush2.bf16.msra.mxu0 0
        %1129 = vmatprep.mubr.bf16.mxu0 0
        %1130 = vmatmul.mubr.bf16.gmra.mxu0 %v991
        %v1131 = vpop.f32.mrf.mxu0
        %v1132 = vadd.f32 %v968, %v1131
        %v1133 = vpop.f32.mrf.mxu0
        %v1134 = vpop.f32.mrf.mxu0
        %v1135 = vpop.f32.mrf.mxu0
        %1136 = vdwg.mxu0
        %v1141 = vunpack.c.l.b16 %v945
        %v1142 = vunpack.c.l.b16 %v946
        %v1143 = vunpack.c.l.b16 %v947
        %v1144 = vunpack.c.l.b16 %v948
        %v1145 = vpack.c.b16 %v1142, %v1141
        %v1146 = vpack.c.b16 %v1144, %v1143
        %1149 = vmatprep.subr.bf16.mxu0 0
        %1150 = vmatpush1.bf16.msra.mxu0 0
        %1151 = vmatprep.subr.bf16.mxu0 0
        %1152 = vmatpush1.bf16.msra.mxu0 0
        %1153 = vmatprep.subr.bf16.mxu0 0
        %1154 = vmatpush1.bf16.msra.mxu0 0
        %1155 = vmatprep.subr.bf16.mxu0 0
        %1156 = vmatpush1.bf16.msra.mxu0 0
        %1157 = vmatprep.subr.bf16.mxu0 0
        %1158 = vmatpush1.bf16.msra.mxu0 0
        %1159 = vmatprep.subr.bf16.mxu0 0
        %1160 = vmatpush1.bf16.msra.mxu0 0
        %1161 = vmatprep.subr.bf16.mxu0 0
        %1162 = vmatpush1.bf16.msra.mxu0 %v1146
        %1163 = vmatprep.subr.bf16.mxu0 0
        %1164 = vmatpush1.bf16.msra.mxu0 %v1145
        %1165 = vmatprep.subr.bf16.mxu0 0
        %1166 = vmatpush2.bf16.msra.mxu0 0
        %1167 = vmatprep.subr.bf16.mxu0 0
        %1168 = vmatpush2.bf16.msra.mxu0 0
        %1169 = vmatprep.subr.bf16.mxu0 0
        %1170 = vmatpush2.bf16.msra.mxu0 0
        %1171 = vmatprep.subr.bf16.mxu0 0
        %1172 = vmatpush2.bf16.msra.mxu0 0
        %1173 = vmatprep.subr.bf16.mxu0 0
        %1174 = vmatpush2.bf16.msra.mxu0 0
        %1175 = vmatprep.subr.bf16.mxu0 0
        %1176 = vmatpush2.bf16.msra.mxu0 0
        %1177 = vmatprep.subr.bf16.mxu0 0
        %1178 = vmatpush2.bf16.msra.mxu0 0
        %1179 = vmatprep.subr.bf16.mxu0 0
        %1180 = vmatpush2.bf16.msra.mxu0 0
        %1181 = vmatprep.mubr.bf16.mxu0 0
        %1182 = vmatmul.mubr.bf16.gmra.mxu0 %v991
        %v1183 = vpop.f32.mrf.mxu0
        %v1184 = vadd.f32 %v972, %v1183
        %v1185 = vpop.f32.mrf.mxu0
        %v1186 = vpop.f32.mrf.mxu0
        %v1187 = vpop.f32.mrf.mxu0
        %1188 = vdwg.mxu0
        %v1189 = vld [vmem:[%s870] sm:$0xf]
        %v1190 = vld [vmem:[%s870 + $0x4] sm:$0xf]
        %v1191 = vld [vmem:[%s870 + $0x8] sm:$0xf]
        %v1192 = vld [vmem:[%s870 + $0xc] sm:$0xf]
        %v1193 = vld [vmem:[%s870 + $0x10] sm:$0xf]
        %v1194 = vld [vmem:[%s870 + $0x14] sm:$0xf]
        %v1195 = vld [vmem:[%s870 + $0x18] sm:$0xf]
        %v1196 = vld [vmem:[%s870 + $0x1c] sm:$0xf]
        %v1197 = vld [vmem:[%s870 + $0x20] sm:$0xf]
        %v1198 = vld [vmem:[%s870 + $0x24] sm:$0xf]
        %v1199 = vld [vmem:[%s870 + $0x28] sm:$0xf]
        %v1200 = vld [vmem:[%s870 + $0x2c] sm:$0xf]
        %v1201 = vld [vmem:[%s870 + $0x30] sm:$0xf]
        %v1202 = vld [vmem:[%s870 + $0x34] sm:$0xf]
        %v1203 = vld [vmem:[%s870 + $0x38] sm:$0xf]
        %v1204 = vld [vmem:[%s870 + $0x3c] sm:$0xf]
        %v1205 = vld [vmem:[%s874] sm:$0x1]
        %v1206 = vld [vmem:[%s874 + $0x1] sm:$0x1]
        %v1207 = vld [vmem:[%s874 + $0x2] sm:$0x1]
        %v1208 = vld [vmem:[%s874 + $0x3] sm:$0x1]
        %v1213 = vlaneseq
        %v1214 = vshrl.u32 %v1213, 7
        %v1215 = vsub.s32 0, %v1214
        %v1216 = vrot.slane %v1205, %v1215
        %v1217 = vlaneseq
        %v1218 = vshrl.u32 %v1217, 7
        %v1219 = vsub.s32 0, %v1218
        %v1220 = vrot.slane %v1206, %v1219
        %v1221 = vlaneseq
        %v1222 = vshrl.u32 %v1221, 7
        %v1223 = vsub.s32 0, %v1222
        %v1224 = vrot.slane %v1207, %v1223
        %v1225 = vlaneseq
        %v1226 = vshrl.u32 %v1225, 7
        %v1227 = vsub.s32 0, %v1226
        %v1228 = vrot.slane %v1208, %v1227
        %v1237 = vunpack.c.l.b16 %v1189
        %v1238 = vunpack.c.l.b16 %v1190
        %v1239 = vunpack.c.l.b16 %v1191
        %v1240 = vunpack.c.l.b16 %v1192
        %v1241 = vpack.c.b16 %v1238, %v1237
        %v1242 = vpack.c.b16 %v1240, %v1239
        %1245 = vmatprep.subr.bf16.mxu0 0
        %1246 = vmatpush1.bf16.msra.mxu0 0
        %1247 = vmatprep.subr.bf16.mxu0 0
        %1248 = vmatpush1.bf16.msra.mxu0 0
        %1249 = vmatprep.subr.bf16.mxu0 0
        %1250 = vmatpush1.bf16.msra.mxu0 0
        %1251 = vmatprep.subr.bf16.mxu0 0
        %1252 = vmatpush1.bf16.msra.mxu0 0
        %1253 = vmatprep.subr.bf16.mxu0 0
        %1254 = vmatpush1.bf16.msra.mxu0 0
        %1255 = vmatprep.subr.bf16.mxu0 0
        %1256 = vmatpush1.bf16.msra.mxu0 0
        %1257 = vmatprep.subr.bf16.mxu0 0
        %1258 = vmatpush1.bf16.msra.mxu0 %v1242
        %1259 = vmatprep.subr.bf16.mxu0 0
        %1260 = vmatpush1.bf16.msra.mxu0 %v1241
        %1261 = vmatprep.subr.bf16.mxu0 0
        %1262 = vmatpush2.bf16.msra.mxu0 0
        %1263 = vmatprep.subr.bf16.mxu0 0
        %1264 = vmatpush2.bf16.msra.mxu0 0
        %1265 = vmatprep.subr.bf16.mxu0 0
        %1266 = vmatpush2.bf16.msra.mxu0 0
        %1267 = vmatprep.subr.bf16.mxu0 0
        %1268 = vmatpush2.bf16.msra.mxu0 0
        %1269 = vmatprep.subr.bf16.mxu0 0
        %1270 = vmatpush2.bf16.msra.mxu0 0
        %1271 = vmatprep.subr.bf16.mxu0 0
        %1272 = vmatpush2.bf16.msra.mxu0 0
        %1273 = vmatprep.subr.bf16.mxu0 0
        %1274 = vmatpush2.bf16.msra.mxu0 0
        %1275 = vmatprep.subr.bf16.mxu0 0
        %1276 = vmatpush2.bf16.msra.mxu0 0
        %1277 = vmatprep.mubr.bf16.mxu0 0
        %1278 = vmatmul.mubr.bf16.gmra.mxu0 %v991
        %v1279 = vpop.f32.mrf.mxu0
        %v1280 = vadd.f32 %v1216, %v1279
        %v1281 = vpop.f32.mrf.mxu0
        %v1282 = vpop.f32.mrf.mxu0
        %v1283 = vpop.f32.mrf.mxu0
        %1284 = vdwg.mxu0
        %v1289 = vunpack.c.l.b16 %v1193
        %v1290 = vunpack.c.l.b16 %v1194
        %v1291 = vunpack.c.l.b16 %v1195
        %v1292 = vunpack.c.l.b16 %v1196
        %v1293 = vpack.c.b16 %v1290, %v1289
        %v1294 = vpack.c.b16 %v1292, %v1291
        %1297 = vmatprep.subr.bf16.mxu0 0
        %1298 = vmatpush1.bf16.msra.mxu0 0
        %1299 = vmatprep.subr.bf16.mxu0 0
        %1300 = vmatpush1.bf16.msra.mxu0 0
        %1301 = vmatprep.subr.bf16.mxu0 0
        %1302 = vmatpush1.bf16.msra.mxu0 0
        %1303 = vmatprep.subr.bf16.mxu0 0
        %1304 = vmatpush1.bf16.msra.mxu0 0
        %1305 = vmatprep.subr.bf16.mxu0 0
        %1306 = vmatpush1.bf16.msra.mxu0 0
        %1307 = vmatprep.subr.bf16.mxu0 0
        %1308 = vmatpush1.bf16.msra.mxu0 0
        %1309 = vmatprep.subr.bf16.mxu0 0
        %1310 = vmatpush1.bf16.msra.mxu0 %v1294
        %1311 = vmatprep.subr.bf16.mxu0 0
        %1312 = vmatpush1.bf16.msra.mxu0 %v1293
        %1313 = vmatprep.subr.bf16.mxu0 0
        %1314 = vmatpush2.bf16.msra.mxu0 0
        %1315 = vmatprep.subr.bf16.mxu0 0
        %1316 = vmatpush2.bf16.msra.mxu0 0
        %1317 = vmatprep.subr.bf16.mxu0 0
        %1318 = vmatpush2.bf16.msra.mxu0 0
        %1319 = vmatprep.subr.bf16.mxu0 0
        %1320 = vmatpush2.bf16.msra.mxu0 0
        %1321 = vmatprep.subr.bf16.mxu0 0
        %1322 = vmatpush2.bf16.msra.mxu0 0
        %1323 = vmatprep.subr.bf16.mxu0 0
        %1324 = vmatpush2.bf16.msra.mxu0 0
        %1325 = vmatprep.subr.bf16.mxu0 0
        %1326 = vmatpush2.bf16.msra.mxu0 0
        %1327 = vmatprep.subr.bf16.mxu0 0
        %1328 = vmatpush2.bf16.msra.mxu0 0
        %1329 = vmatprep.mubr.bf16.mxu0 0
        %1330 = vmatmul.mubr.bf16.gmra.mxu0 %v991
        %v1331 = vpop.f32.mrf.mxu0
        %v1332 = vadd.f32 %v1220, %v1331
        %v1333 = vpop.f32.mrf.mxu0
        %v1334 = vpop.f32.mrf.mxu0
        %v1335 = vpop.f32.mrf.mxu0
        %1336 = vdwg.mxu0
        %v1341 = vunpack.c.l.b16 %v1197
        %v1342 = vunpack.c.l.b16 %v1198
        %v1343 = vunpack.c.l.b16 %v1199
        %v1344 = vunpack.c.l.b16 %v1200
        %v1345 = vpack.c.b16 %v1342, %v1341
        %v1346 = vpack.c.b16 %v1344, %v1343
        %1349 = vmatprep.subr.bf16.mxu0 0
        %1350 = vmatpush1.bf16.msra.mxu0 0
        %1351 = vmatprep.subr.bf16.mxu0 0
        %1352 = vmatpush1.bf16.msra.mxu0 0
        %1353 = vmatprep.subr.bf16.mxu0 0
        %1354 = vmatpush1.bf16.msra.mxu0 0
        %1355 = vmatprep.subr.bf16.mxu0 0
        %1356 = vmatpush1.bf16.msra.mxu0 0
        %1357 = vmatprep.subr.bf16.mxu0 0
        %1358 = vmatpush1.bf16.msra.mxu0 0
        %1359 = vmatprep.subr.bf16.mxu0 0
        %1360 = vmatpush1.bf16.msra.mxu0 0
        %1361 = vmatprep.subr.bf16.mxu0 0
        %1362 = vmatpush1.bf16.msra.mxu0 %v1346
        %1363 = vmatprep.subr.bf16.mxu0 0
        %1364 = vmatpush1.bf16.msra.mxu0 %v1345
        %1365 = vmatprep.subr.bf16.mxu0 0
        %1366 = vmatpush2.bf16.msra.mxu0 0
        %1367 = vmatprep.subr.bf16.mxu0 0
        %1368 = vmatpush2.bf16.msra.mxu0 0
        %1369 = vmatprep.subr.bf16.mxu0 0
        %1370 = vmatpush2.bf16.msra.mxu0 0
        %1371 = vmatprep.subr.bf16.mxu0 0
        %1372 = vmatpush2.bf16.msra.mxu0 0
        %1373 = vmatprep.subr.bf16.mxu0 0
        %1374 = vmatpush2.bf16.msra.mxu0 0
        %1375 = vmatprep.subr.bf16.mxu0 0
        %1376 = vmatpush2.bf16.msra.mxu0 0
        %1377 = vmatprep.subr.bf16.mxu0 0
        %1378 = vmatpush2.bf16.msra.mxu0 0
        %1379 = vmatprep.subr.bf16.mxu0 0
        %1380 = vmatpush2.bf16.msra.mxu0 0
        %1381 = vmatprep.mubr.bf16.mxu0 0
        %1382 = vmatmul.mubr.bf16.gmra.mxu0 %v991
        %v1383 = vpop.f32.mrf.mxu0
        %v1384 = vadd.f32 %v1224, %v1383
        %v1385 = vpop.f32.mrf.mxu0
        %v1386 = vpop.f32.mrf.mxu0
        %v1387 = vpop.f32.mrf.mxu0
        %1388 = vdwg.mxu0
        %v1393 = vunpack.c.l.b16 %v1201
        %v1394 = vunpack.c.l.b16 %v1202
        %v1395 = vunpack.c.l.b16 %v1203
        %v1396 = vunpack.c.l.b16 %v1204
        %v1397 = vpack.c.b16 %v1394, %v1393
        %v1398 = vpack.c.b16 %v1396, %v1395
        %1401 = vmatprep.subr.bf16.mxu0 0
        %1402 = vmatpush1.bf16.msra.mxu0 0
        %1403 = vmatprep.subr.bf16.mxu0 0
        %1404 = vmatpush1.bf16.msra.mxu0 0
        %1405 = vmatprep.subr.bf16.mxu0 0
        %1406 = vmatpush1.bf16.msra.mxu0 0
        %1407 = vmatprep.subr.bf16.mxu0 0
        %1408 = vmatpush1.bf16.msra.mxu0 0
        %1409 = vmatprep.subr.bf16.mxu0 0
        %1410 = vmatpush1.bf16.msra.mxu0 0
        %1411 = vmatprep.subr.bf16.mxu0 0
        %1412 = vmatpush1.bf16.msra.mxu0 0
        %1413 = vmatprep.subr.bf16.mxu0 0
        %1414 = vmatpush1.bf16.msra.mxu0 %v1398
        %1415 = vmatprep.subr.bf16.mxu0 0
        %1416 = vmatpush1.bf16.msra.mxu0 %v1397
        %1417 = vmatprep.subr.bf16.mxu0 0
        %1418 = vmatpush2.bf16.msra.mxu0 0
        %1419 = vmatprep.subr.bf16.mxu0 0
        %1420 = vmatpush2.bf16.msra.mxu0 0
        %1421 = vmatprep.subr.bf16.mxu0 0
        %1422 = vmatpush2.bf16.msra.mxu0 0
        %1423 = vmatprep.subr.bf16.mxu0 0
        %1424 = vmatpush2.bf16.msra.mxu0 0
        %1425 = vmatprep.subr.bf16.mxu0 0
        %1426 = vmatpush2.bf16.msra.mxu0 0
        %1427 = vmatprep.subr.bf16.mxu0 0
        %1428 = vmatpush2.bf16.msra.mxu0 0
        %1429 = vmatprep.subr.bf16.mxu0 0
        %1430 = vmatpush2.bf16.msra.mxu0 0
        %1431 = vmatprep.subr.bf16.mxu0 0
        %1432 = vmatpush2.bf16.msra.mxu0 0
        %1433 = vmatprep.mubr.bf16.mxu0 0
        %1434 = vmatmul.mubr.bf16.gmra.mxu0 %v991
        %v1435 = vpop.f32.mrf.mxu0
        %v1436 = vadd.f32 %v1228, %v1435
        %v1437 = vpop.f32.mrf.mxu0
        %v1438 = vpop.f32.mrf.mxu0
        %v1439 = vpop.f32.mrf.mxu0
        %1440 = vdwg.mxu0
        %v1441 = vld [vmem:[%s879] sm:$0xf]
        %v1442 = vld [vmem:[%s879 + $0x4] sm:$0xf]
        %v1443 = vld [vmem:[%s879 + $0x8] sm:$0xf]
        %v1444 = vld [vmem:[%s879 + $0xc] sm:$0xf]
        %v1445 = vld [vmem:[%s879 + $0x10] sm:$0xf]
        %v1446 = vld [vmem:[%s879 + $0x14] sm:$0xf]
        %v1447 = vld [vmem:[%s879 + $0x18] sm:$0xf]
        %v1448 = vld [vmem:[%s879 + $0x1c] sm:$0xf]
        %v1449 = vld [vmem:[%s879 + $0x20] sm:$0xf]
        %v1450 = vld [vmem:[%s879 + $0x24] sm:$0xf]
        %v1451 = vld [vmem:[%s879 + $0x28] sm:$0xf]
        %v1452 = vld [vmem:[%s879 + $0x2c] sm:$0xf]
        %v1453 = vld [vmem:[%s879 + $0x30] sm:$0xf]
        %v1454 = vld [vmem:[%s879 + $0x34] sm:$0xf]
        %v1455 = vld [vmem:[%s879 + $0x38] sm:$0xf]
        %v1456 = vld [vmem:[%s879 + $0x3c] sm:$0xf]
        %v1457 = vld [vmem:[%s883] sm:$0x1]
        %v1458 = vld [vmem:[%s883 + $0x1] sm:$0x1]
        %v1459 = vld [vmem:[%s883 + $0x2] sm:$0x1]
        %v1460 = vld [vmem:[%s883 + $0x3] sm:$0x1]
        %v1465 = vlaneseq
        %v1466 = vshrl.u32 %v1465, 7
        %v1467 = vsub.s32 0, %v1466
        %v1468 = vrot.slane %v1457, %v1467
        %v1469 = vlaneseq
        %v1470 = vshrl.u32 %v1469, 7
        %v1471 = vsub.s32 0, %v1470
        %v1472 = vrot.slane %v1458, %v1471
        %v1473 = vlaneseq
        %v1474 = vshrl.u32 %v1473, 7
        %v1475 = vsub.s32 0, %v1474
        %v1476 = vrot.slane %v1459, %v1475
        %v1477 = vlaneseq
        %v1478 = vshrl.u32 %v1477, 7
        %v1479 = vsub.s32 0, %v1478
        %v1480 = vrot.slane %v1460, %v1479
        %v1489 = vunpack.c.l.b16 %v1441
        %v1490 = vunpack.c.l.b16 %v1442
        %v1491 = vunpack.c.l.b16 %v1443
        %v1492 = vunpack.c.l.b16 %v1444
        %v1493 = vpack.c.b16 %v1490, %v1489
        %v1494 = vpack.c.b16 %v1492, %v1491
        %1497 = vmatprep.subr.bf16.mxu0 0
        %1498 = vmatpush1.bf16.msra.mxu0 0
        %1499 = vmatprep.subr.bf16.mxu0 0
        %1500 = vmatpush1.bf16.msra.mxu0 0
        %1501 = vmatprep.subr.bf16.mxu0 0
        %1502 = vmatpush1.bf16.msra.mxu0 0
        %1503 = vmatprep.subr.bf16.mxu0 0
        %1504 = vmatpush1.bf16.msra.mxu0 0
        %1505 = vmatprep.subr.bf16.mxu0 0
        %1506 = vmatpush1.bf16.msra.mxu0 0
        %1507 = vmatprep.subr.bf16.mxu0 0
        %1508 = vmatpush1.bf16.msra.mxu0 0
        %1509 = vmatprep.subr.bf16.mxu0 0
        %1510 = vmatpush1.bf16.msra.mxu0 %v1494
        %1511 = vmatprep.subr.bf16.mxu0 0
        %1512 = vmatpush1.bf16.msra.mxu0 %v1493
        %1513 = vmatprep.subr.bf16.mxu0 0
        %1514 = vmatpush2.bf16.msra.mxu0 0
        %1515 = vmatprep.subr.bf16.mxu0 0
        %1516 = vmatpush2.bf16.msra.mxu0 0
        %1517 = vmatprep.subr.bf16.mxu0 0
        %1518 = vmatpush2.bf16.msra.mxu0 0
        %1519 = vmatprep.subr.bf16.mxu0 0
        %1520 = vmatpush2.bf16.msra.mxu0 0
        %1521 = vmatprep.subr.bf16.mxu0 0
        %1522 = vmatpush2.bf16.msra.mxu0 0
        %1523 = vmatprep.subr.bf16.mxu0 0
        %1524 = vmatpush2.bf16.msra.mxu0 0
        %1525 = vmatprep.subr.bf16.mxu0 0
        %1526 = vmatpush2.bf16.msra.mxu0 0
        %1527 = vmatprep.subr.bf16.mxu0 0
        %1528 = vmatpush2.bf16.msra.mxu0 0
        %1529 = vmatprep.mubr.bf16.mxu0 0
        %1530 = vmatmul.mubr.bf16.gmra.mxu0 %v991
        %v1531 = vpop.f32.mrf.mxu0
        %v1532 = vadd.f32 %v1468, %v1531
        %v1533 = vpop.f32.mrf.mxu0
        %v1534 = vpop.f32.mrf.mxu0
        %v1535 = vpop.f32.mrf.mxu0
        %1536 = vdwg.mxu0
        %v1541 = vunpack.c.l.b16 %v1445
        %v1542 = vunpack.c.l.b16 %v1446
        %v1543 = vunpack.c.l.b16 %v1447
        %v1544 = vunpack.c.l.b16 %v1448
        %v1545 = vpack.c.b16 %v1542, %v1541
        %v1546 = vpack.c.b16 %v1544, %v1543
        %1549 = vmatprep.subr.bf16.mxu0 0
        %1550 = vmatpush1.bf16.msra.mxu0 0
        %1551 = vmatprep.subr.bf16.mxu0 0
        %1552 = vmatpush1.bf16.msra.mxu0 0
        %1553 = vmatprep.subr.bf16.mxu0 0
        %1554 = vmatpush1.bf16.msra.mxu0 0
        %1555 = vmatprep.subr.bf16.mxu0 0
        %1556 = vmatpush1.bf16.msra.mxu0 0
        %1557 = vmatprep.subr.bf16.mxu0 0
        %1558 = vmatpush1.bf16.msra.mxu0 0
        %1559 = vmatprep.subr.bf16.mxu0 0
        %1560 = vmatpush1.bf16.msra.mxu0 0
        %1561 = vmatprep.subr.bf16.mxu0 0
        %1562 = vmatpush1.bf16.msra.mxu0 %v1546
        %1563 = vmatprep.subr.bf16.mxu0 0
        %1564 = vmatpush1.bf16.msra.mxu0 %v1545
        %1565 = vmatprep.subr.bf16.mxu0 0
        %1566 = vmatpush2.bf16.msra.mxu0 0
        %1567 = vmatprep.subr.bf16.mxu0 0
        %1568 = vmatpush2.bf16.msra.mxu0 0
        %1569 = vmatprep.subr.bf16.mxu0 0
        %1570 = vmatpush2.bf16.msra.mxu0 0
        %1571 = vmatprep.subr.bf16.mxu0 0
        %1572 = vmatpush2.bf16.msra.mxu0 0
        %1573 = vmatprep.subr.bf16.mxu0 0
        %1574 = vmatpush2.bf16.msra.mxu0 0
        %1575 = vmatprep.subr.bf16.mxu0 0
        %1576 = vmatpush2.bf16.msra.mxu0 0
        %1577 = vmatprep.subr.bf16.mxu0 0
        %1578 = vmatpush2.bf16.msra.mxu0 0
        %1579 = vmatprep.subr.bf16.mxu0 0
        %1580 = vmatpush2.bf16.msra.mxu0 0
        %1581 = vmatprep.mubr.bf16.mxu0 0
        %1582 = vmatmul.mubr.bf16.gmra.mxu0 %v991
        %v1583 = vpop.f32.mrf.mxu0
        %v1584 = vadd.f32 %v1472, %v1583
        %v1585 = vpop.f32.mrf.mxu0
        %v1586 = vpop.f32.mrf.mxu0
        %v1587 = vpop.f32.mrf.mxu0
        %1588 = vdwg.mxu0
        %v1593 = vunpack.c.l.b16 %v1449
        %v1594 = vunpack.c.l.b16 %v1450
        %v1595 = vunpack.c.l.b16 %v1451
        %v1596 = vunpack.c.l.b16 %v1452
        %v1597 = vpack.c.b16 %v1594, %v1593
        %v1598 = vpack.c.b16 %v1596, %v1595
        %1601 = vmatprep.subr.bf16.mxu0 0
        %1602 = vmatpush1.bf16.msra.mxu0 0
        %1603 = vmatprep.subr.bf16.mxu0 0
        %1604 = vmatpush1.bf16.msra.mxu0 0
        %1605 = vmatprep.subr.bf16.mxu0 0
        %1606 = vmatpush1.bf16.msra.mxu0 0
        %1607 = vmatprep.subr.bf16.mxu0 0
        %1608 = vmatpush1.bf16.msra.mxu0 0
        %1609 = vmatprep.subr.bf16.mxu0 0
        %1610 = vmatpush1.bf16.msra.mxu0 0
        %1611 = vmatprep.subr.bf16.mxu0 0
        %1612 = vmatpush1.bf16.msra.mxu0 0
        %1613 = vmatprep.subr.bf16.mxu0 0
        %1614 = vmatpush1.bf16.msra.mxu0 %v1598
        %1615 = vmatprep.subr.bf16.mxu0 0
        %1616 = vmatpush1.bf16.msra.mxu0 %v1597
        %1617 = vmatprep.subr.bf16.mxu0 0
        %1618 = vmatpush2.bf16.msra.mxu0 0
        %1619 = vmatprep.subr.bf16.mxu0 0
        %1620 = vmatpush2.bf16.msra.mxu0 0
        %1621 = vmatprep.subr.bf16.mxu0 0
        %1622 = vmatpush2.bf16.msra.mxu0 0
        %1623 = vmatprep.subr.bf16.mxu0 0
        %1624 = vmatpush2.bf16.msra.mxu0 0
        %1625 = vmatprep.subr.bf16.mxu0 0
        %1626 = vmatpush2.bf16.msra.mxu0 0
        %1627 = vmatprep.subr.bf16.mxu0 0
        %1628 = vmatpush2.bf16.msra.mxu0 0
        %1629 = vmatprep.subr.bf16.mxu0 0
        %1630 = vmatpush2.bf16.msra.mxu0 0
        %1631 = vmatprep.subr.bf16.mxu0 0
        %1632 = vmatpush2.bf16.msra.mxu0 0
        %1633 = vmatprep.mubr.bf16.mxu0 0
        %1634 = vmatmul.mubr.bf16.gmra.mxu0 %v991
        %v1635 = vpop.f32.mrf.mxu0
        %v1636 = vadd.f32 %v1476, %v1635
        %v1637 = vpop.f32.mrf.mxu0
        %v1638 = vpop.f32.mrf.mxu0
        %v1639 = vpop.f32.mrf.mxu0
        %1640 = vdwg.mxu0
        %v1645 = vunpack.c.l.b16 %v1453
        %v1646 = vunpack.c.l.b16 %v1454
        %v1647 = vunpack.c.l.b16 %v1455
        %v1648 = vunpack.c.l.b16 %v1456
        %v1649 = vpack.c.b16 %v1646, %v1645
        %v1650 = vpack.c.b16 %v1648, %v1647
        %1653 = vmatprep.subr.bf16.mxu0 0
        %1654 = vmatpush1.bf16.msra.mxu0 0
        %1655 = vmatprep.subr.bf16.mxu0 0
        %1656 = vmatpush1.bf16.msra.mxu0 0
        %1657 = vmatprep.subr.bf16.mxu0 0
        %1658 = vmatpush1.bf16.msra.mxu0 0
        %1659 = vmatprep.subr.bf16.mxu0 0
        %1660 = vmatpush1.bf16.msra.mxu0 0
        %1661 = vmatprep.subr.bf16.mxu0 0
        %1662 = vmatpush1.bf16.msra.mxu0 0
        %1663 = vmatprep.subr.bf16.mxu0 0
        %1664 = vmatpush1.bf16.msra.mxu0 0
        %1665 = vmatprep.subr.bf16.mxu0 0
        %1666 = vmatpush1.bf16.msra.mxu0 %v1650
        %1667 = vmatprep.subr.bf16.mxu0 0
        %1668 = vmatpush1.bf16.msra.mxu0 %v1649
        %1669 = vmatprep.subr.bf16.mxu0 0
        %1670 = vmatpush2.bf16.msra.mxu0 0
        %1671 = vmatprep.subr.bf16.mxu0 0
        %1672 = vmatpush2.bf16.msra.mxu0 0
        %1673 = vmatprep.subr.bf16.mxu0 0
        %1674 = vmatpush2.bf16.msra.mxu0 0
        %1675 = vmatprep.subr.bf16.mxu0 0
        %1676 = vmatpush2.bf16.msra.mxu0 0
        %1677 = vmatprep.subr.bf16.mxu0 0
        %1678 = vmatpush2.bf16.msra.mxu0 0
        %1679 = vmatprep.subr.bf16.mxu0 0
        %1680 = vmatpush2.bf16.msra.mxu0 0
        %1681 = vmatprep.subr.bf16.mxu0 0
        %1682 = vmatpush2.bf16.msra.mxu0 0
        %1683 = vmatprep.subr.bf16.mxu0 0
        %1684 = vmatpush2.bf16.msra.mxu0 0
        %1685 = vmatprep.mubr.bf16.mxu0 0
        %1686 = vmatmul.mubr.bf16.gmra.mxu0 %v991
        %v1687 = vpop.f32.mrf.mxu0
        %v1688 = vadd.f32 %v1480, %v1687
        %v1689 = vpop.f32.mrf.mxu0
        %v1690 = vpop.f32.mrf.mxu0
        %v1691 = vpop.f32.mrf.mxu0
        %1692 = vdwg.mxu0
        %v1693 = vpack.c.bf16 %v1028, %v1028
        %v1694 = vpack.c.bf16 %v1080, %v1080
        %v1695 = vpack.c.bf16 %v1132, %v1132
        %v1696 = vpack.c.bf16 %v1184, %v1184
        %v1697 = vpack.c.bf16 %v1280, %v1280
        %v1698 = vpack.c.bf16 %v1332, %v1332
        %v1699 = vpack.c.bf16 %v1384, %v1384
        %v1700 = vpack.c.bf16 %v1436, %v1436
        %vm1701 = vcmask 64512
        %v1703 = vsel %vm1701, %v1693, 0
        %v1706 = vsel %vm1701, %v1697, 0
        %1708 = vmatprep.subr.bf16.mxu0 0
        %1709 = vmatpush1.bf16.xpose.msra.mxu0 0
        %1710 = vmatprep.subr.bf16.mxu0 0
        %1711 = vmatpush1.bf16.xpose.msra.mxu0 0
        %1712 = vmatprep.subr.bf16.mxu0 0
        %1713 = vmatpush1.bf16.xpose.msra.mxu0 0
        %1714 = vmatprep.subr.bf16.mxu0 0
        %1715 = vmatpush1.bf16.xpose.msra.mxu0 0
        %1716 = vmatprep.subr.bf16.mxu0 0
        %1717 = vmatpush1.bf16.xpose.msra.mxu0 0
        %1718 = vmatprep.subr.bf16.mxu0 0
        %1719 = vmatpush1.bf16.xpose.msra.mxu0 0
        %1720 = vmatprep.subr.bf16.mxu0 0
        %1721 = vmatpush1.bf16.xpose.msra.mxu0 0
        %1722 = vmatprep.subr.bf16.mxu0 0
        %1723 = vmatpush1.bf16.xpose.msra.mxu0 %v1706
        %1724 = vmatprep.subr.bf16.mxu0 0
        %1725 = vmatpush2.bf16.xpose.msra.mxu0 0
        %1726 = vmatprep.subr.bf16.mxu0 0
        %1727 = vmatpush2.bf16.xpose.msra.mxu0 0
        %1728 = vmatprep.subr.bf16.mxu0 0
        %1729 = vmatpush2.bf16.xpose.msra.mxu0 0
        %1730 = vmatprep.subr.bf16.mxu0 0
        %1731 = vmatpush2.bf16.xpose.msra.mxu0 0
        %1732 = vmatprep.subr.bf16.mxu0 0
        %1733 = vmatpush2.bf16.xpose.msra.mxu0 0
        %1734 = vmatprep.subr.bf16.mxu0 0
        %1735 = vmatpush2.bf16.xpose.msra.mxu0 0
        %1736 = vmatprep.subr.bf16.mxu0 0
        %1737 = vmatpush2.bf16.xpose.msra.mxu0 0
        %1738 = vmatprep.subr.bf16.mxu0 0
        %1739 = vmatpush2.bf16.xpose.msra.mxu0 0
        %1740 = vmatprep.mubr.bf16.mxu0 0
        %1741 = vmatmul.mubr.bf16.gmra.mxu0 %v1703
        %v1742 = vpop.f32.mrf.mxu0
        %v1743 = vadd.f32 0.0, %v1742
        %v1744 = vpop.f32.mrf.mxu0
        %v1745 = vpop.f32.mrf.mxu0
        %v1746 = vpop.f32.mrf.mxu0
        %1747 = vdwg.mxu0
        %v1749 = vsel %vm1701, %v1694, 0
        %v1752 = vsel %vm1701, %v1698, 0
        %1754 = vmatprep.subr.bf16.mxu0 0
        %1755 = vmatpush1.bf16.xpose.msra.mxu0 0
        %1756 = vmatprep.subr.bf16.mxu0 0
        %1757 = vmatpush1.bf16.xpose.msra.mxu0 0
        %1758 = vmatprep.subr.bf16.mxu0 0
        %1759 = vmatpush1.bf16.xpose.msra.mxu0 0
        %1760 = vmatprep.subr.bf16.mxu0 0
        %1761 = vmatpush1.bf16.xpose.msra.mxu0 0
        %1762 = vmatprep.subr.bf16.mxu0 0
        %1763 = vmatpush1.bf16.xpose.msra.mxu0 0
        %1764 = vmatprep.subr.bf16.mxu0 0
        %1765 = vmatpush1.bf16.xpose.msra.mxu0 0
        %1766 = vmatprep.subr.bf16.mxu0 0
        %1767 = vmatpush1.bf16.xpose.msra.mxu0 0
        %1768 = vmatprep.subr.bf16.mxu0 0
        %1769 = vmatpush1.bf16.xpose.msra.mxu0 %v1752
        %1770 = vmatprep.subr.bf16.mxu0 0
        %1771 = vmatpush2.bf16.xpose.msra.mxu0 0
        %1772 = vmatprep.subr.bf16.mxu0 0
        %1773 = vmatpush2.bf16.xpose.msra.mxu0 0
        %1774 = vmatprep.subr.bf16.mxu0 0
        %1775 = vmatpush2.bf16.xpose.msra.mxu0 0
        %1776 = vmatprep.subr.bf16.mxu0 0
        %1777 = vmatpush2.bf16.xpose.msra.mxu0 0
        %1778 = vmatprep.subr.bf16.mxu0 0
        %1779 = vmatpush2.bf16.xpose.msra.mxu0 0
        %1780 = vmatprep.subr.bf16.mxu0 0
        %1781 = vmatpush2.bf16.xpose.msra.mxu0 0
        %1782 = vmatprep.subr.bf16.mxu0 0
        %1783 = vmatpush2.bf16.xpose.msra.mxu0 0
        %1784 = vmatprep.subr.bf16.mxu0 0
        %1785 = vmatpush2.bf16.xpose.msra.mxu0 0
        %1786 = vmatprep.mubr.bf16.mxu0 0
        %1787 = vmatmul.mubr.bf16.gmra.mxu0 %v1749
        %v1788 = vpop.f32.mrf.mxu0
        %v1789 = vadd.f32 0.0, %v1788
        %v1790 = vpop.f32.mrf.mxu0
        %v1791 = vpop.f32.mrf.mxu0
        %v1792 = vpop.f32.mrf.mxu0
        %1793 = vdwg.mxu0
        %v1795 = vsel %vm1701, %v1695, 0
        %v1798 = vsel %vm1701, %v1699, 0
        %1800 = vmatprep.subr.bf16.mxu0 0
        %1801 = vmatpush1.bf16.xpose.msra.mxu0 0
        %1802 = vmatprep.subr.bf16.mxu0 0
        %1803 = vmatpush1.bf16.xpose.msra.mxu0 0
        %1804 = vmatprep.subr.bf16.mxu0 0
        %1805 = vmatpush1.bf16.xpose.msra.mxu0 0
        %1806 = vmatprep.subr.bf16.mxu0 0
        %1807 = vmatpush1.bf16.xpose.msra.mxu0 0
        %1808 = vmatprep.subr.bf16.mxu0 0
        %1809 = vmatpush1.bf16.xpose.msra.mxu0 0
        %1810 = vmatprep.subr.bf16.mxu0 0
        %1811 = vmatpush1.bf16.xpose.msra.mxu0 0
        %1812 = vmatprep.subr.bf16.mxu0 0
        %1813 = vmatpush1.bf16.xpose.msra.mxu0 0
        %1814 = vmatprep.subr.bf16.mxu0 0
        %1815 = vmatpush1.bf16.xpose.msra.mxu0 %v1798
        %1816 = vmatprep.subr.bf16.mxu0 0
        %1817 = vmatpush2.bf16.xpose.msra.mxu0 0
        %1818 = vmatprep.subr.bf16.mxu0 0
        %1819 = vmatpush2.bf16.xpose.msra.mxu0 0
        %1820 = vmatprep.subr.bf16.mxu0 0
        %1821 = vmatpush2.bf16.xpose.msra.mxu0 0
        %1822 = vmatprep.subr.bf16.mxu0 0
        %1823 = vmatpush2.bf16.xpose.msra.mxu0 0
        %1824 = vmatprep.subr.bf16.mxu0 0
        %1825 = vmatpush2.bf16.xpose.msra.mxu0 0
        %1826 = vmatprep.subr.bf16.mxu0 0
        %1827 = vmatpush2.bf16.xpose.msra.mxu0 0
        %1828 = vmatprep.subr.bf16.mxu0 0
        %1829 = vmatpush2.bf16.xpose.msra.mxu0 0
        %1830 = vmatprep.subr.bf16.mxu0 0
        %1831 = vmatpush2.bf16.xpose.msra.mxu0 0
        %1832 = vmatprep.mubr.bf16.mxu0 0
        %1833 = vmatmul.mubr.bf16.gmra.mxu0 %v1795
        %v1834 = vpop.f32.mrf.mxu0
        %v1835 = vadd.f32 0.0, %v1834
        %v1836 = vpop.f32.mrf.mxu0
        %v1837 = vpop.f32.mrf.mxu0
        %v1838 = vpop.f32.mrf.mxu0
        %1839 = vdwg.mxu0
        %v1841 = vsel %vm1701, %v1696, 0
        %v1844 = vsel %vm1701, %v1700, 0
        %1846 = vmatprep.subr.bf16.mxu0 0
        %1847 = vmatpush1.bf16.xpose.msra.mxu0 0
        %1848 = vmatprep.subr.bf16.mxu0 0
        %1849 = vmatpush1.bf16.xpose.msra.mxu0 0
        %1850 = vmatprep.subr.bf16.mxu0 0
        %1851 = vmatpush1.bf16.xpose.msra.mxu0 0
        %1852 = vmatprep.subr.bf16.mxu0 0
        %1853 = vmatpush1.bf16.xpose.msra.mxu0 0
        %1854 = vmatprep.subr.bf16.mxu0 0
        %1855 = vmatpush1.bf16.xpose.msra.mxu0 0
        %1856 = vmatprep.subr.bf16.mxu0 0
        %1857 = vmatpush1.bf16.xpose.msra.mxu0 0
        %1858 = vmatprep.subr.bf16.mxu0 0
        %1859 = vmatpush1.bf16.xpose.msra.mxu0 0
        %1860 = vmatprep.subr.bf16.mxu0 0
        %1861 = vmatpush1.bf16.xpose.msra.mxu0 %v1844
        %1862 = vmatprep.subr.bf16.mxu0 0
        %1863 = vmatpush2.bf16.xpose.msra.mxu0 0
        %1864 = vmatprep.subr.bf16.mxu0 0
        %1865 = vmatpush2.bf16.xpose.msra.mxu0 0
        %1866 = vmatprep.subr.bf16.mxu0 0
        %1867 = vmatpush2.bf16.xpose.msra.mxu0 0
        %1868 = vmatprep.subr.bf16.mxu0 0
        %1869 = vmatpush2.bf16.xpose.msra.mxu0 0
        %1870 = vmatprep.subr.bf16.mxu0 0
        %1871 = vmatpush2.bf16.xpose.msra.mxu0 0
        %1872 = vmatprep.subr.bf16.mxu0 0
        %1873 = vmatpush2.bf16.xpose.msra.mxu0 0
        %1874 = vmatprep.subr.bf16.mxu0 0
        %1875 = vmatpush2.bf16.xpose.msra.mxu0 0
        %1876 = vmatprep.subr.bf16.mxu0 0
        %1877 = vmatpush2.bf16.xpose.msra.mxu0 0
        %1878 = vmatprep.mubr.bf16.mxu0 0
        %1879 = vmatmul.mubr.bf16.gmra.mxu0 %v1841
        %v1880 = vpop.f32.mrf.mxu0
        %v1881 = vadd.f32 0.0, %v1880
        %v1882 = vpop.f32.mrf.mxu0
        %v1883 = vpop.f32.mrf.mxu0
        %v1884 = vpop.f32.mrf.mxu0
        %1885 = vdwg.mxu0
        %v1886 = vmul.f32 %v1743, 0.35355338
        %v1887 = vmul.f32 %v1789, 0.35355338
        %v1888 = vmul.f32 %v1835, 0.35355338
        %v1889 = vmul.f32 %v1881, 0.35355338
        %v1891 = vlaneseq
        %v1892 = vshrl.u32 %v1891, 7
        %v1893 = vsub.s32 0, %v1892
        %v1894 = vrot.slane %v931, %v1893
        %v1896 = vadd.f32 %v1886, %v1894
        %v1897 = vadd.f32 %v1887, %v1894
        %v1898 = vadd.f32 %v1888, %v1894
        %v1899 = vadd.f32 %v1889, %v1894
        %v1900 = vsel %vm1701, %v1896, -inf
        %1901 = vmax.xlane.f32.xlu0 %v1900
        %v1902 = vpop.xlane.xlu0 %1901
        %v1903 = vsel %vm1701, %v1897, -inf
        %1904 = vmax.xlane.f32.xlu0 %v1903
        %v1905 = vpop.xlane.xlu0 %1904
        %v1906 = vsel %vm1701, %v1898, -inf
        %1907 = vmax.xlane.f32.xlu0 %v1906
        %v1908 = vpop.xlane.xlu0 %1907
        %v1909 = vsel %vm1701, %v1899, -inf
        %1910 = vmax.xlane.f32.xlu0 %v1909
        %v1911 = vpop.xlane.xlu0 %1910
        %v1912 = vsub.f32 %v1896, %v1902
        %v1913 = vsub.f32 %v1897, %v1905
        %v1914 = vsub.f32 %v1898, %v1908
        %v1915 = vsub.f32 %v1899, %v1911
        %v1916 = vmul.f32 %v1912, 1.442695
        %v1917 = vpow.pop %v1916
        %v1918 = vmul.f32 %v1913, 1.442695
        %v1919 = vpow.pop %v1918
        %v1920 = vmul.f32 %v1914, 1.442695
        %v1921 = vpow.pop %v1920
        %v1922 = vmul.f32 %v1915, 1.442695
        %v1923 = vpow.pop %v1922
        %v1924 = vsel %vm1701, %v1917, 0.0
        %1925 = vadd.xlane.f32.xlu0 %v1924
        %v1926 = vpop.xlane.xlu0 %1925
        %v1927 = vsel %vm1701, %v1919, 0.0
        %1928 = vadd.xlane.f32.xlu0 %v1927
        %v1929 = vpop.xlane.xlu0 %1928
        %v1930 = vsel %vm1701, %v1921, 0.0
        %1931 = vadd.xlane.f32.xlu0 %v1930
        %v1932 = vpop.xlane.xlu0 %1931
        %v1933 = vsel %vm1701, %v1923, 0.0
        %1934 = vadd.xlane.f32.xlu0 %v1933
        %v1935 = vpop.xlane.xlu0 %1934
        %v1936 = vrcp.pop %v1926
        %v1937 = vrcp.pop %v1929
        %v1938 = vrcp.pop %v1932
        %v1939 = vrcp.pop %v1935
        %v1940 = vmul.f32 %v1917, %v1936
        %v1941 = vmul.f32 %v1919, %v1937
        %v1942 = vmul.f32 %v1921, %v1938
        %v1943 = vmul.f32 %v1923, %v1939
        %v1944 = vpack.c.bf16 %v1940, %v1940
        %v1945 = vpack.c.bf16 %v1941, %v1941
        %v1946 = vpack.c.bf16 %v1942, %v1942
        %v1947 = vpack.c.bf16 %v1943, %v1943
        %v1948 = vpack.c.bf16 %v1532, %v1532
        %v1949 = vpack.c.bf16 %v1584, %v1584
        %v1950 = vpack.c.bf16 %v1636, %v1636
        %v1951 = vpack.c.bf16 %v1688, %v1688
        %v1953 = vsel %vm1701, %v1944, 0
        %vm1955 = vcmask 1043456
        %v1957 = vsel %vm1955, %v1948, 0
        %1959 = vmatprep.subr.bf16.mxu0 0
        %1960 = vmatpush1.bf16.msra.mxu0 0
        %1961 = vmatprep.subr.bf16.mxu0 0
        %1962 = vmatpush1.bf16.msra.mxu0 0
        %1963 = vmatprep.subr.bf16.mxu0 0
        %1964 = vmatpush1.bf16.msra.mxu0 0
        %1965 = vmatprep.subr.bf16.mxu0 0
        %1966 = vmatpush1.bf16.msra.mxu0 0
        %1967 = vmatprep.subr.bf16.mxu0 0
        %1968 = vmatpush1.bf16.msra.mxu0 0
        %1969 = vmatprep.subr.bf16.mxu0 0
        %1970 = vmatpush1.bf16.msra.mxu0 0
        %1971 = vmatprep.subr.bf16.mxu0 0
        %1972 = vmatpush1.bf16.msra.mxu0 0
        %1973 = vmatprep.subr.bf16.mxu0 0
        %1974 = vmatpush1.bf16.msra.mxu0 %v1957
        %1975 = vmatprep.subr.bf16.mxu0 0
        %1976 = vmatpush2.bf16.msra.mxu0 0
        %1977 = vmatprep.subr.bf16.mxu0 0
        %1978 = vmatpush2.bf16.msra.mxu0 0
        %1979 = vmatprep.subr.bf16.mxu0 0
        %1980 = vmatpush2.bf16.msra.mxu0 0
        %1981 = vmatprep.subr.bf16.mxu0 0
        %1982 = vmatpush2.bf16.msra.mxu0 0
        %1983 = vmatprep.subr.bf16.mxu0 0
        %1984 = vmatpush2.bf16.msra.mxu0 0
        %1985 = vmatprep.subr.bf16.mxu0 0
        %1986 = vmatpush2.bf16.msra.mxu0 0
        %1987 = vmatprep.subr.bf16.mxu0 0
        %1988 = vmatpush2.bf16.msra.mxu0 0
        %1989 = vmatprep.subr.bf16.mxu0 0
        %1990 = vmatpush2.bf16.msra.mxu0 0
        %1991 = vmatprep.mubr.bf16.mxu0 0
        %1992 = vmatmul.mubr.bf16.gmra.mxu0 %v1953
        %v1993 = vpop.f32.mrf.mxu0
        %v1994 = vadd.f32 0.0, %v1993
        %v1995 = vpop.f32.mrf.mxu0
        %v1996 = vpop.f32.mrf.mxu0
        %v1997 = vpop.f32.mrf.mxu0
        %1998 = vdwg.mxu0
        %v2000 = vsel %vm1701, %v1945, 0
        %v2003 = vsel %vm1955, %v1949, 0
        %2005 = vmatprep.subr.bf16.mxu0 0
        %2006 = vmatpush1.bf16.msra.mxu0 0
        %2007 = vmatprep.subr.bf16.mxu0 0
        %2008 = vmatpush1.bf16.msra.mxu0 0
        %2009 = vmatprep.subr.bf16.mxu0 0
        %2010 = vmatpush1.bf16.msra.mxu0 0
        %2011 = vmatprep.subr.bf16.mxu0 0
        %2012 = vmatpush1.bf16.msra.mxu0 0
        %2013 = vmatprep.subr.bf16.mxu0 0
        %2014 = vmatpush1.bf16.msra.mxu0 0
        %2015 = vmatprep.subr.bf16.mxu0 0
        %2016 = vmatpush1.bf16.msra.mxu0 0
        %2017 = vmatprep.subr.bf16.mxu0 0
        %2018 = vmatpush1.bf16.msra.mxu0 0
        %2019 = vmatprep.subr.bf16.mxu0 0
        %2020 = vmatpush1.bf16.msra.mxu0 %v2003
        %2021 = vmatprep.subr.bf16.mxu0 0
        %2022 = vmatpush2.bf16.msra.mxu0 0
        %2023 = vmatprep.subr.bf16.mxu0 0
        %2024 = vmatpush2.bf16.msra.mxu0 0
        %2025 = vmatprep.subr.bf16.mxu0 0
        %2026 = vmatpush2.bf16.msra.mxu0 0
        %2027 = vmatprep.subr.bf16.mxu0 0
        %2028 = vmatpush2.bf16.msra.mxu0 0
        %2029 = vmatprep.subr.bf16.mxu0 0
        %2030 = vmatpush2.bf16.msra.mxu0 0
        %2031 = vmatprep.subr.bf16.mxu0 0
        %2032 = vmatpush2.bf16.msra.mxu0 0
        %2033 = vmatprep.subr.bf16.mxu0 0
        %2034 = vmatpush2.bf16.msra.mxu0 0
        %2035 = vmatprep.subr.bf16.mxu0 0
        %2036 = vmatpush2.bf16.msra.mxu0 0
        %2037 = vmatprep.mubr.bf16.mxu0 0
        %2038 = vmatmul.mubr.bf16.gmra.mxu0 %v2000
        %v2039 = vpop.f32.mrf.mxu0
        %v2040 = vadd.f32 0.0, %v2039
        %v2041 = vpop.f32.mrf.mxu0
        %v2042 = vpop.f32.mrf.mxu0
        %v2043 = vpop.f32.mrf.mxu0
        %2044 = vdwg.mxu0
        %v2046 = vsel %vm1701, %v1946, 0
        %v2049 = vsel %vm1955, %v1950, 0
        %2051 = vmatprep.subr.bf16.mxu0 0
        %2052 = vmatpush1.bf16.msra.mxu0 0
        %2053 = vmatprep.subr.bf16.mxu0 0
        %2054 = vmatpush1.bf16.msra.mxu0 0
        %2055 = vmatprep.subr.bf16.mxu0 0
        %2056 = vmatpush1.bf16.msra.mxu0 0
        %2057 = vmatprep.subr.bf16.mxu0 0
        %2058 = vmatpush1.bf16.msra.mxu0 0
        %2059 = vmatprep.subr.bf16.mxu0 0
        %2060 = vmatpush1.bf16.msra.mxu0 0
        %2061 = vmatprep.subr.bf16.mxu0 0
        %2062 = vmatpush1.bf16.msra.mxu0 0
        %2063 = vmatprep.subr.bf16.mxu0 0
        %2064 = vmatpush1.bf16.msra.mxu0 0
        %2065 = vmatprep.subr.bf16.mxu0 0
        %2066 = vmatpush1.bf16.msra.mxu0 %v2049
        %2067 = vmatprep.subr.bf16.mxu0 0
        %2068 = vmatpush2.bf16.msra.mxu0 0
        %2069 = vmatprep.subr.bf16.mxu0 0
        %2070 = vmatpush2.bf16.msra.mxu0 0
        %2071 = vmatprep.subr.bf16.mxu0 0
        %2072 = vmatpush2.bf16.msra.mxu0 0
        %2073 = vmatprep.subr.bf16.mxu0 0
        %2074 = vmatpush2.bf16.msra.mxu0 0
        %2075 = vmatprep.subr.bf16.mxu0 0
        %2076 = vmatpush2.bf16.msra.mxu0 0
        %2077 = vmatprep.subr.bf16.mxu0 0
        %2078 = vmatpush2.bf16.msra.mxu0 0
        %2079 = vmatprep.subr.bf16.mxu0 0
        %2080 = vmatpush2.bf16.msra.mxu0 0
        %2081 = vmatprep.subr.bf16.mxu0 0
        %2082 = vmatpush2.bf16.msra.mxu0 0
        %2083 = vmatprep.mubr.bf16.mxu0 0
        %2084 = vmatmul.mubr.bf16.gmra.mxu0 %v2046
        %v2085 = vpop.f32.mrf.mxu0
        %v2086 = vadd.f32 0.0, %v2085
        %v2087 = vpop.f32.mrf.mxu0
        %v2088 = vpop.f32.mrf.mxu0
        %v2089 = vpop.f32.mrf.mxu0
        %2090 = vdwg.mxu0
        %v2092 = vsel %vm1701, %v1947, 0
        %v2095 = vsel %vm1955, %v1951, 0
        %2097 = vmatprep.subr.bf16.mxu0 0
        %2098 = vmatpush1.bf16.msra.mxu0 0
        %2099 = vmatprep.subr.bf16.mxu0 0
        %2100 = vmatpush1.bf16.msra.mxu0 0
        %2101 = vmatprep.subr.bf16.mxu0 0
        %2102 = vmatpush1.bf16.msra.mxu0 0
        %2103 = vmatprep.subr.bf16.mxu0 0
        %2104 = vmatpush1.bf16.msra.mxu0 0
        %2105 = vmatprep.subr.bf16.mxu0 0
        %2106 = vmatpush1.bf16.msra.mxu0 0
        %2107 = vmatprep.subr.bf16.mxu0 0
        %2108 = vmatpush1.bf16.msra.mxu0 0
        %2109 = vmatprep.subr.bf16.mxu0 0
        %2110 = vmatpush1.bf16.msra.mxu0 0
        %2111 = vmatprep.subr.bf16.mxu0 0
        %2112 = vmatpush1.bf16.msra.mxu0 %v2095
        %2113 = vmatprep.subr.bf16.mxu0 0
        %2114 = vmatpush2.bf16.msra.mxu0 0
        %2115 = vmatprep.subr.bf16.mxu0 0
        %2116 = vmatpush2.bf16.msra.mxu0 0
        %2117 = vmatprep.subr.bf16.mxu0 0
        %2118 = vmatpush2.bf16.msra.mxu0 0
        %2119 = vmatprep.subr.bf16.mxu0 0
        %2120 = vmatpush2.bf16.msra.mxu0 0
        %2121 = vmatprep.subr.bf16.mxu0 0
        %2122 = vmatpush2.bf16.msra.mxu0 0
        %2123 = vmatprep.subr.bf16.mxu0 0
        %2124 = vmatpush2.bf16.msra.mxu0 0
        %2125 = vmatprep.subr.bf16.mxu0 0
        %2126 = vmatpush2.bf16.msra.mxu0 0
        %2127 = vmatprep.subr.bf16.mxu0 0
        %2128 = vmatpush2.bf16.msra.mxu0 0
        %2129 = vmatprep.mubr.bf16.mxu0 0
        %2130 = vmatmul.mubr.bf16.gmra.mxu0 %v2092
        %v2131 = vpop.f32.mrf.mxu0
        %v2132 = vadd.f32 0.0, %v2131
        %v2133 = vpop.f32.mrf.mxu0
        %v2134 = vpop.f32.mrf.mxu0
        %v2135 = vpop.f32.mrf.mxu0
        %2136 = vdwg.mxu0
        %v2137 = vpack.c.bf16 %v1994, %v1994
        %v2138 = vpack.c.bf16 %v2040, %v2040
        %v2139 = vpack.c.bf16 %v2086, %v2086
        %v2140 = vpack.c.bf16 %v2132, %v2132
        %v2141 = vld [vmem:[%s888] sm:$0xf]
        %v2142 = vld [vmem:[%s888 + $0x4] sm:$0xf]
        %v2143 = vld [vmem:[%s888 + $0x8] sm:$0xf]
        %v2144 = vld [vmem:[%s888 + $0xc] sm:$0xf]
        %v2146 = vsel %vm1701, %v2137, 0
        %v2149 = vsel %vm1955, %v2141, 0
        %2151 = vmatprep.subr.bf16.mxu0 0
        %2152 = vmatpush1.bf16.msra.mxu0 0
        %2153 = vmatprep.subr.bf16.mxu0 0
        %2154 = vmatpush1.bf16.msra.mxu0 0
        %2155 = vmatprep.subr.bf16.mxu0 0
        %2156 = vmatpush1.bf16.msra.mxu0 0
        %2157 = vmatprep.subr.bf16.mxu0 0
        %2158 = vmatpush1.bf16.msra.mxu0 0
        %2159 = vmatprep.subr.bf16.mxu0 0
        %2160 = vmatpush1.bf16.msra.mxu0 0
        %2161 = vmatprep.subr.bf16.mxu0 0
        %2162 = vmatpush1.bf16.msra.mxu0 0
        %2163 = vmatprep.subr.bf16.mxu0 0
        %2164 = vmatpush1.bf16.msra.mxu0 0
        %2165 = vmatprep.subr.bf16.mxu0 0
        %2166 = vmatpush1.bf16.msra.mxu0 %v2149
        %2167 = vmatprep.subr.bf16.mxu0 0
        %2168 = vmatpush2.bf16.msra.mxu0 0
        %2169 = vmatprep.subr.bf16.mxu0 0
        %2170 = vmatpush2.bf16.msra.mxu0 0
        %2171 = vmatprep.subr.bf16.mxu0 0
        %2172 = vmatpush2.bf16.msra.mxu0 0
        %2173 = vmatprep.subr.bf16.mxu0 0
        %2174 = vmatpush2.bf16.msra.mxu0 0
        %2175 = vmatprep.subr.bf16.mxu0 0
        %2176 = vmatpush2.bf16.msra.mxu0 0
        %2177 = vmatprep.subr.bf16.mxu0 0
        %2178 = vmatpush2.bf16.msra.mxu0 0
        %2179 = vmatprep.subr.bf16.mxu0 0
        %2180 = vmatpush2.bf16.msra.mxu0 0
        %2181 = vmatprep.subr.bf16.mxu0 0
        %2182 = vmatpush2.bf16.msra.mxu0 0
        %2183 = vmatprep.mubr.bf16.mxu0 0
        %2184 = vmatmul.mubr.bf16.gmra.mxu0 %v2146
        %v2185 = vpop.f32.mrf.mxu0
        %v2186 = vadd.f32 0.0, %v2185
        %v2187 = vpop.f32.mrf.mxu0
        %v2188 = vpop.f32.mrf.mxu0
        %v2189 = vpop.f32.mrf.mxu0
        %2190 = vdwg.mxu0
        %v2192 = vsel %vm1701, %v2138, 0
        %v2195 = vsel %vm1955, %v2142, 0
        %2197 = vmatprep.subr.bf16.mxu0 0
        %2198 = vmatpush1.bf16.msra.mxu0 0
        %2199 = vmatprep.subr.bf16.mxu0 0
        %2200 = vmatpush1.bf16.msra.mxu0 0
        %2201 = vmatprep.subr.bf16.mxu0 0
        %2202 = vmatpush1.bf16.msra.mxu0 0
        %2203 = vmatprep.subr.bf16.mxu0 0
        %2204 = vmatpush1.bf16.msra.mxu0 0
        %2205 = vmatprep.subr.bf16.mxu0 0
        %2206 = vmatpush1.bf16.msra.mxu0 0
        %2207 = vmatprep.subr.bf16.mxu0 0
        %2208 = vmatpush1.bf16.msra.mxu0 0
        %2209 = vmatprep.subr.bf16.mxu0 0
        %2210 = vmatpush1.bf16.msra.mxu0 0
        %2211 = vmatprep.subr.bf16.mxu0 0
        %2212 = vmatpush1.bf16.msra.mxu0 %v2195
        %2213 = vmatprep.subr.bf16.mxu0 0
        %2214 = vmatpush2.bf16.msra.mxu0 0
        %2215 = vmatprep.subr.bf16.mxu0 0
        %2216 = vmatpush2.bf16.msra.mxu0 0
        %2217 = vmatprep.subr.bf16.mxu0 0
        %2218 = vmatpush2.bf16.msra.mxu0 0
        %2219 = vmatprep.subr.bf16.mxu0 0
        %2220 = vmatpush2.bf16.msra.mxu0 0
        %2221 = vmatprep.subr.bf16.mxu0 0
        %2222 = vmatpush2.bf16.msra.mxu0 0
        %2223 = vmatprep.subr.bf16.mxu0 0
        %2224 = vmatpush2.bf16.msra.mxu0 0
        %2225 = vmatprep.subr.bf16.mxu0 0
        %2226 = vmatpush2.bf16.msra.mxu0 0
        %2227 = vmatprep.subr.bf16.mxu0 0
        %2228 = vmatpush2.bf16.msra.mxu0 0
        %2229 = vmatprep.mubr.bf16.mxu0 0
        %2230 = vmatmul.mubr.bf16.gmra.mxu0 %v2192
        %v2231 = vpop.f32.mrf.mxu0
        %v2232 = vadd.f32 0.0, %v2231
        %v2233 = vpop.f32.mrf.mxu0
        %v2234 = vpop.f32.mrf.mxu0
        %v2235 = vpop.f32.mrf.mxu0
        %2236 = vdwg.mxu0
        %v2238 = vsel %vm1701, %v2139, 0
        %v2241 = vsel %vm1955, %v2143, 0
        %2243 = vmatprep.subr.bf16.mxu0 0
        %2244 = vmatpush1.bf16.msra.mxu0 0
        %2245 = vmatprep.subr.bf16.mxu0 0
        %2246 = vmatpush1.bf16.msra.mxu0 0
        %2247 = vmatprep.subr.bf16.mxu0 0
        %2248 = vmatpush1.bf16.msra.mxu0 0
        %2249 = vmatprep.subr.bf16.mxu0 0
        %2250 = vmatpush1.bf16.msra.mxu0 0
        %2251 = vmatprep.subr.bf16.mxu0 0
        %2252 = vmatpush1.bf16.msra.mxu0 0
        %2253 = vmatprep.subr.bf16.mxu0 0
        %2254 = vmatpush1.bf16.msra.mxu0 0
        %2255 = vmatprep.subr.bf16.mxu0 0
        %2256 = vmatpush1.bf16.msra.mxu0 0
        %2257 = vmatprep.subr.bf16.mxu0 0
        %2258 = vmatpush1.bf16.msra.mxu0 %v2241
        %2259 = vmatprep.subr.bf16.mxu0 0
        %2260 = vmatpush2.bf16.msra.mxu0 0
        %2261 = vmatprep.subr.bf16.mxu0 0
        %2262 = vmatpush2.bf16.msra.mxu0 0
        %2263 = vmatprep.subr.bf16.mxu0 0
        %2264 = vmatpush2.bf16.msra.mxu0 0
        %2265 = vmatprep.subr.bf16.mxu0 0
        %2266 = vmatpush2.bf16.msra.mxu0 0
        %2267 = vmatprep.subr.bf16.mxu0 0
        %2268 = vmatpush2.bf16.msra.mxu0 0
        %2269 = vmatprep.subr.bf16.mxu0 0
        %2270 = vmatpush2.bf16.msra.mxu0 0
        %2271 = vmatprep.subr.bf16.mxu0 0
        %2272 = vmatpush2.bf16.msra.mxu0 0
        %2273 = vmatprep.subr.bf16.mxu0 0
        %2274 = vmatpush2.bf16.msra.mxu0 0
        %2275 = vmatprep.mubr.bf16.mxu0 0
        %2276 = vmatmul.mubr.bf16.gmra.mxu0 %v2238
        %v2277 = vpop.f32.mrf.mxu0
        %v2278 = vadd.f32 0.0, %v2277
        %v2279 = vpop.f32.mrf.mxu0
        %v2280 = vpop.f32.mrf.mxu0
        %v2281 = vpop.f32.mrf.mxu0
        %2282 = vdwg.mxu0
        %v2284 = vsel %vm1701, %v2140, 0
        %v2287 = vsel %vm1955, %v2144, 0
        %2289 = vmatprep.subr.bf16.mxu0 0
        %2290 = vmatpush1.bf16.msra.mxu0 0
        %2291 = vmatprep.subr.bf16.mxu0 0
        %2292 = vmatpush1.bf16.msra.mxu0 0
        %2293 = vmatprep.subr.bf16.mxu0 0
        %2294 = vmatpush1.bf16.msra.mxu0 0
        %2295 = vmatprep.subr.bf16.mxu0 0
        %2296 = vmatpush1.bf16.msra.mxu0 0
        %2297 = vmatprep.subr.bf16.mxu0 0
        %2298 = vmatpush1.bf16.msra.mxu0 0
        %2299 = vmatprep.subr.bf16.mxu0 0
        %2300 = vmatpush1.bf16.msra.mxu0 0
        %2301 = vmatprep.subr.bf16.mxu0 0
        %2302 = vmatpush1.bf16.msra.mxu0 0
        %2303 = vmatprep.subr.bf16.mxu0 0
        %2304 = vmatpush1.bf16.msra.mxu0 %v2287
        %2305 = vmatprep.subr.bf16.mxu0 0
        %2306 = vmatpush2.bf16.msra.mxu0 0
        %2307 = vmatprep.subr.bf16.mxu0 0
        %2308 = vmatpush2.bf16.msra.mxu0 0
        %2309 = vmatprep.subr.bf16.mxu0 0
        %2310 = vmatpush2.bf16.msra.mxu0 0
        %2311 = vmatprep.subr.bf16.mxu0 0
        %2312 = vmatpush2.bf16.msra.mxu0 0
        %2313 = vmatprep.subr.bf16.mxu0 0
        %2314 = vmatpush2.bf16.msra.mxu0 0
        %2315 = vmatprep.subr.bf16.mxu0 0
        %2316 = vmatpush2.bf16.msra.mxu0 0
        %2317 = vmatprep.subr.bf16.mxu0 0
        %2318 = vmatpush2.bf16.msra.mxu0 0
        %2319 = vmatprep.subr.bf16.mxu0 0
        %2320 = vmatpush2.bf16.msra.mxu0 0
        %2321 = vmatprep.mubr.bf16.mxu0 0
        %2322 = vmatmul.mubr.bf16.gmra.mxu0 %v2284
        %v2323 = vpop.f32.mrf.mxu0
        %v2324 = vadd.f32 0.0, %v2323
        %v2325 = vpop.f32.mrf.mxu0
        %v2326 = vpop.f32.mrf.mxu0
        %v2327 = vpop.f32.mrf.mxu0
        %2328 = vdwg.mxu0
        %v2329 = vsel %vm989, %v2186, 0.0
        %v2330 = vsel %vm989, %v2232, 0.0
        %v2331 = vadd.f32 %v2329, %v2330
        %v2332 = vsel %vm989, %v2278, 0.0
        %v2333 = vadd.f32 %v2331, %v2332
        %v2334 = vsel %vm989, %v2324, 0.0
        %v2335 = vadd.f32 %v2333, %v2334
        %v2336 = vld [vmem:[%s891] sm:$0x1]
        %v2338 = vlaneseq
        %v2339 = vshrl.u32 %v2338, 7
        %v2340 = vsub.s32 0, %v2339
        %v2341 = vrot.slane %v2336, %v2340
        %v2343 = vadd.f32 %v2335, %v2341
        %v2344 = vadd.f32 %v928, %v2343
        %v2345 = vld [vmem:[%s894] sm:$0x1]
        %v2346 = vld [vmem:[%s897] sm:$0x1]
        %v2347 = vsel %vm989, %v2344, 0.0
        %2348 = vadd.xlane.f32.xlu0 %v2347
        %v2349 = vpop.xlane.xlu0 %2348
        %v2350 = vrcp.pop 32.0
        %v2351 = vmul.f32 %v2349, %v2350
        %v2352 = vsub.f32 %v2344, %v2351
        %v2353 = vmul.f32 %v2352, %v2352
        %v2354 = vsel %vm989, %v2353, 0.0
        %2355 = vadd.xlane.f32.xlu0 %v2354
        %v2356 = vpop.xlane.xlu0 %2355
        %v2357 = vmul.f32 %v2356, %v2350
        %v2358 = vadd.f32 %v2357, 1e-05
        %v2359 = vrsqrt.pop %v2358
        %v2360 = vmul.f32 %v2352, %v2359
        %v2362 = vlaneseq
        %v2363 = vshrl.u32 %v2362, 7
        %v2364 = vsub.s32 0, %v2363
        %v2365 = vrot.slane %v2345, %v2364
        %v2367 = vmul.f32 %v2360, %v2365
        %v2369 = vlaneseq
        %v2370 = vshrl.u32 %v2369, 7
        %v2371 = vsub.s32 0, %v2370
        %v2372 = vrot.slane %v2346, %v2371
        %v2374 = vadd.f32 %v2367, %v2372
        %v2375 = vpack.c.bf16 %v2374, %v2374
        %v2376 = vld [vmem:[%s902] sm:$0xf]
        %v2377 = vld [vmem:[%s902 + $0x4] sm:$0xf]
        %v2378 = vld [vmem:[%s902 + $0x8] sm:$0xf]
        %v2379 = vld [vmem:[%s902 + $0xc] sm:$0xf]
        %v2380 = vld [vmem:[%s905] sm:$0x1]
        %v2382 = vlaneseq
        %v2383 = vshrl.u32 %v2382, 7
        %v2384 = vsub.s32 0, %v2383
        %v2385 = vrot.slane %v2380, %v2384
        %v2391 = vunpack.c.l.b16 %v2376
        %v2392 = vunpack.c.l.b16 %v2377
        %v2393 = vunpack.c.l.b16 %v2378
        %v2394 = vunpack.c.l.b16 %v2379
        %v2395 = vpack.c.b16 %v2392, %v2391
        %v2396 = vpack.c.b16 %v2394, %v2393
        %v2400 = vsel %vm989, %v2375, 0
        %2402 = vmatprep.subr.bf16.mxu0 0
        %2403 = vmatpush1.bf16.msra.mxu0 0
        %2404 = vmatprep.subr.bf16.mxu0 0
        %2405 = vmatpush1.bf16.msra.mxu0 0
        %2406 = vmatprep.subr.bf16.mxu0 0
        %2407 = vmatpush1.bf16.msra.mxu0 0
        %2408 = vmatprep.subr.bf16.mxu0 0
        %2409 = vmatpush1.bf16.msra.mxu0 0
        %2410 = vmatprep.subr.bf16.mxu0 0
        %2411 = vmatpush1.bf16.msra.mxu0 0
        %2412 = vmatprep.subr.bf16.mxu0 0
        %2413 = vmatpush1.bf16.msra.mxu0 0
        %2414 = vmatprep.subr.bf16.mxu0 0
        %2415 = vmatpush1.bf16.msra.mxu0 %v2396
        %2416 = vmatprep.subr.bf16.mxu0 0
        %2417 = vmatpush1.bf16.msra.mxu0 %v2395
        %2418 = vmatprep.subr.bf16.mxu0 0
        %2419 = vmatpush2.bf16.msra.mxu0 0
        %2420 = vmatprep.subr.bf16.mxu0 0
        %2421 = vmatpush2.bf16.msra.mxu0 0
        %2422 = vmatprep.subr.bf16.mxu0 0
        %2423 = vmatpush2.bf16.msra.mxu0 0
        %2424 = vmatprep.subr.bf16.mxu0 0
        %2425 = vmatpush2.bf16.msra.mxu0 0
        %2426 = vmatprep.subr.bf16.mxu0 0
        %2427 = vmatpush2.bf16.msra.mxu0 0
        %2428 = vmatprep.subr.bf16.mxu0 0
        %2429 = vmatpush2.bf16.msra.mxu0 0
        %2430 = vmatprep.subr.bf16.mxu0 0
        %2431 = vmatpush2.bf16.msra.mxu0 0
        %2432 = vmatprep.subr.bf16.mxu0 0
        %2433 = vmatpush2.bf16.msra.mxu0 0
        %2434 = vmatprep.mubr.bf16.mxu0 0
        %2435 = vmatmul.mubr.bf16.gmra.mxu0 %v2400
        %v2436 = vpop.f32.mrf.mxu0
        %v2437 = vadd.f32 %v2385, %v2436
        %v2438 = vpop.f32.mrf.mxu0
        %v2439 = vpop.f32.mrf.mxu0
        %v2440 = vpop.f32.mrf.mxu0
        %2441 = vdwg.mxu0
        %v2442 = vmax.f32 %v2437, 0.0
        %v2443 = vpack.c.bf16 %v2442, %v2442
        %v2444 = vld [vmem:[%s910] sm:$0xf]
        %v2445 = vld [vmem:[%s910 + $0x4] sm:$0xf]
        %v2446 = vld [vmem:[%s910 + $0x8] sm:$0xf]
        %v2447 = vld [vmem:[%s910 + $0xc] sm:$0xf]
        %v2448 = vld [vmem:[%s910 + $0x10] sm:$0xf]
        %v2449 = vld [vmem:[%s910 + $0x14] sm:$0xf]
        %v2450 = vld [vmem:[%s910 + $0x18] sm:$0xf]
        %v2451 = vld [vmem:[%s910 + $0x1c] sm:$0xf]
        %v2452 = vld [vmem:[%s913] sm:$0x1]
        %v2454 = vlaneseq
        %v2455 = vshrl.u32 %v2454, 7
        %v2456 = vsub.s32 0, %v2455
        %v2457 = vrot.slane %v2452, %v2456
        %v2467 = vunpack.c.l.b16 %v2444
        %v2468 = vunpack.c.l.b16 %v2445
        %v2469 = vunpack.c.l.b16 %v2446
        %v2470 = vunpack.c.l.b16 %v2447
        %v2471 = vunpack.c.l.b16 %v2448
        %v2472 = vunpack.c.l.b16 %v2449
        %v2473 = vunpack.c.l.b16 %v2450
        %v2474 = vunpack.c.l.b16 %v2451
        %v2475 = vpack.c.b16 %v2468, %v2467
        %v2476 = vpack.c.b16 %v2470, %v2469
        %v2477 = vpack.c.b16 %v2472, %v2471
        %v2478 = vpack.c.b16 %v2474, %v2473
        %vm2483 = vcmask 523264
        %v2485 = vsel %vm2483, %v2443, 0
        %2487 = vmatprep.subr.bf16.mxu0 0
        %2488 = vmatpush1.bf16.msra.mxu0 0
        %2489 = vmatprep.subr.bf16.mxu0 0
        %2490 = vmatpush1.bf16.msra.mxu0 0
        %2491 = vmatprep.subr.bf16.mxu0 0
        %2492 = vmatpush1.bf16.msra.mxu0 0
        %2493 = vmatprep.subr.bf16.mxu0 0
        %2494 = vmatpush1.bf16.msra.mxu0 0
        %2495 = vmatprep.subr.bf16.mxu0 0
        %2496 = vmatpush1.bf16.msra.mxu0 %v2478
        %2497 = vmatprep.subr.bf16.mxu0 0
        %2498 = vmatpush1.bf16.msra.mxu0 %v2477
        %2499 = vmatprep.subr.bf16.mxu0 0
        %2500 = vmatpush1.bf16.msra.mxu0 %v2476
        %2501 = vmatprep.subr.bf16.mxu0 0
        %2502 = vmatpush1.bf16.msra.mxu0 %v2475
        %2503 = vmatprep.subr.bf16.mxu0 0
        %2504 = vmatpush2.bf16.msra.mxu0 0
        %2505 = vmatprep.subr.bf16.mxu0 0
        %2506 = vmatpush2.bf16.msra.mxu0 0
        %2507 = vmatprep.subr.bf16.mxu0 0
        %2508 = vmatpush2.bf16.msra.mxu0 0
        %2509 = vmatprep.subr.bf16.mxu0 0
        %2510 = vmatpush2.bf16.msra.mxu0 0
        %2511 = vmatprep.subr.bf16.mxu0 0
        %2512 = vmatpush2.bf16.msra.mxu0 0
        %2513 = vmatprep.subr.bf16.mxu0 0
        %2514 = vmatpush2.bf16.msra.mxu0 0
        %2515 = vmatprep.subr.bf16.mxu0 0
        %2516 = vmatpush2.bf16.msra.mxu0 0
        %2517 = vmatprep.subr.bf16.mxu0 0
        %2518 = vmatpush2.bf16.msra.mxu0 0
        %2519 = vmatprep.mubr.bf16.mxu0 0
        %2520 = vmatmul.mubr.bf16.gmra.mxu0 %v2485
        %v2521 = vpop.f32.mrf.mxu0
        %v2522 = vadd.f32 %v2457, %v2521
        %v2523 = vpop.f32.mrf.mxu0
        %v2524 = vpop.f32.mrf.mxu0
        %v2525 = vpop.f32.mrf.mxu0
        %2526 = vdwg.mxu0
        %v2527 = vadd.f32 %v2374, %v2522
        %v2528 = vld [vmem:[%s916] sm:$0x1]
        %v2529 = vld [vmem:[%s919] sm:$0x1]
        %v2530 = vsel %vm989, %v2527, 0.0
        %2531 = vadd.xlane.f32.xlu0 %v2530
        %v2532 = vpop.xlane.xlu0 %2531
        %v2533 = vmul.f32 %v2532, %v2350
        %v2534 = vsub.f32 %v2527, %v2533
        %v2535 = vmul.f32 %v2534, %v2534
        %v2536 = vsel %vm989, %v2535, 0.0
        %2537 = vadd.xlane.f32.xlu0 %v2536
        %v2538 = vpop.xlane.xlu0 %2537
        %v2539 = vmul.f32 %v2538, %v2350
        %v2540 = vadd.f32 %v2539, 1e-05
        %v2541 = vrsqrt.pop %v2540
        %v2542 = vmul.f32 %v2534, %v2541
        %v2544 = vlaneseq
        %v2545 = vshrl.u32 %v2544, 7
        %v2546 = vsub.s32 0, %v2545
        %v2547 = vrot.slane %v2528, %v2546
        %v2549 = vmul.f32 %v2542, %v2547
        %v2551 = vlaneseq
        %v2552 = vshrl.u32 %v2551, 7
        %v2553 = vsub.s32 0, %v2552
        %v2554 = vrot.slane %v2529, %v2553
        %v2556 = vadd.f32 %v2549, %v2554
        %2557 = vst.msk [vmem:[#allocation2] sm:$0xff] %vm989, %v2556
        %p2558 = scmp.eq.s32.totalorder %s39, 1
        // Predicated region
        $region105: #{tpu_custom_call.1} parent=99 // pred_check
          %p2559 = pneg %p2558
        $region106: #{tpu_custom_call.1} parent=99 // pred_check_branch
          %2561 = sbr.rel (%p2559) target = $region108
        $region107: #{tpu_custom_call.1} parent=99 // pred_region
          %v2562 = vld [vmem:[%s18] sm:$0x1]
          %v2563 = vpack.c.bf16 %v2556, %v2556
          %v2564 = vld [vmem:[%s19] sm:$0x3]
          %2566 = vset.pattern.permute.xlu0 0
          %2567 = vperm.xlu0 %2566, %v2564
          %v2568 = vpop.permute.xlu0 %2567
          %v2571 = vsel %vm989, %v2562, 0
          %v2574 = vsel %vm989, %v2563, 0
          %2576 = vmatprep.subr.bf16.mxu0 0
          %2577 = vmatpush1.bf16.xpose.msra.mxu0 0
          %2578 = vmatprep.subr.bf16.mxu0 0
          %2579 = vmatpush1.bf16.xpose.msra.mxu0 0
          %2580 = vmatprep.subr.bf16.mxu0 0
          %2581 = vmatpush1.bf16.xpose.msra.mxu0 0
          %2582 = vmatprep.subr.bf16.mxu0 0
          %2583 = vmatpush1.bf16.xpose.msra.mxu0 0
          %2584 = vmatprep.subr.bf16.mxu0 0
          %2585 = vmatpush1.bf16.xpose.msra.mxu0 0
          %2586 = vmatprep.subr.bf16.mxu0 0
          %2587 = vmatpush1.bf16.xpose.msra.mxu0 0
          %2588 = vmatprep.subr.bf16.mxu0 0
          %2589 = vmatpush1.bf16.xpose.msra.mxu0 0
          %2590 = vmatprep.subr.bf16.mxu0 0
          %2591 = vmatpush1.bf16.xpose.msra.mxu0 %v2574
          %2592 = vmatprep.subr.bf16.mxu0 0
          %2593 = vmatpush2.bf16.xpose.msra.mxu0 0
          %2594 = vmatprep.subr.bf16.mxu0 0
          %2595 = vmatpush2.bf16.xpose.msra.mxu0 0
          %2596 = vmatprep.subr.bf16.mxu0 0
          %2597 = vmatpush2.bf16.xpose.msra.mxu0 0
          %2598 = vmatprep.subr.bf16.mxu0 0
          %2599 = vmatpush2.bf16.xpose.msra.mxu0 0
          %2600 = vmatprep.subr.bf16.mxu0 0
          %2601 = vmatpush2.bf16.xpose.msra.mxu0 0
          %2602 = vmatprep.subr.bf16.mxu0 0
          %2603 = vmatpush2.bf16.xpose.msra.mxu0 0
          %2604 = vmatprep.subr.bf16.mxu0 0
          %2605 = vmatpush2.bf16.xpose.msra.mxu0 0
          %2606 = vmatprep.subr.bf16.mxu0 0
          %2607 = vmatpush2.bf16.xpose.msra.mxu0 0
          %2608 = vmatprep.mubr.bf16.mxu0 0
          %2609 = vmatmul.mubr.bf16.gmra.mxu0 %v2571
          %v2610 = vpop.f32.mrf.mxu0
          %v2611 = vadd.f32 %v2568, %v2610
          %v2612 = vpop.f32.mrf.mxu0
          %v2613 = vpop.f32.mrf.mxu0
          %v2614 = vpop.f32.mrf.mxu0
          %2615 = vdwg.mxu0
          %vm2616 = vcmask 58368
          %2617 = vst.msk [vmem:[%s849] sm:$0x3] %vm2616, %v2611
        $region108: #{tpu_custom_call.1} parent=99 // pred_fallthru
          _
        %s2618 = sand.u32 %s564, 1
        %s2619 = scalar_lea.sflag [#allocation4], %s2618
        %s2620 = sand.u32 %s564, 1
        %s2621 = smul.addr %s2620, 2
        %s2622 = scalar_lea.vmem [#allocation3], %s2621
        // Predicated region
        $region109: #{tpu_custom_call.1} parent=99 // pred_check
          %p2623 = pneg %p574
        $region110: #{tpu_custom_call.1} parent=99 // pred_check_branch
          %2625 = sbr.rel (%p2623) target = $region112
        $region111: #{tpu_custom_call.1} parent=99 // pred_region
          %s2627 = ssub.s32 32, 32
          %2628 = vsyncadd %s2619, %s2627
          %s2629 = smul.addr %s38, 32
          %s2630 = scalar_lea.hbm %s20, %s2629
          %s2632 = sshll.u32 %s2622, 4
          %s2633 = int_to_ptr.vmem [resolvable:$true] %s2632
          %2635 = dma.vmem_to_hbm [thread:$0]  %s2633, 32, %s2630, %s2619
        $region112: #{tpu_custom_call.1} parent=99 // pred_fallthru
          _
      $region100: #{tpu_custom_call.1} parent=5 // pred_fallthru
        _
      %p2636 = scmp.le.s32.totalorder 2, %s29
      // Predicated region
      $region113: #{tpu_custom_call.1} parent=5 // pred_check
        %p2637 = pneg %p2636
      $region114: #{tpu_custom_call.1} parent=5 // pred_check_branch
        %2639 = sbr.rel (%p2637) target = $region116
      $region115: #{tpu_custom_call.1} parent=5 // pred_region
        %s2640 = ssub.s32 %s29, 2
        // Predicated region
        $region117: #{tpu_custom_call.1} parent=115 // pred_check
          %p2641 = pneg %p580
        $region118: #{tpu_custom_call.1} parent=115 // pred_check_branch
          %2643 = sbr.rel (%p2641) target = $region120
        $region119: #{tpu_custom_call.1} parent=115 // pred_region
          %s2644 = sand.u32 %s565, 1
          %s2645 = scalar_lea.sflag [#allocation4], %s2644
          %s2646 = sand.u32 %s565, 1
          %s2647 = smul.addr %s2646, 2
          %s2648 = scalar_lea.vmem [#allocation3], %s2647
          %2649 = dma.done %s2645, 32
        $region120: #{tpu_custom_call.1} parent=115 // pred_fallthru
          _
      $region116: #{tpu_custom_call.1} parent=5 // pred_fallthru
        _
    $region6: #{tpu_custom_call.1} parent=1 // loop_footer
      %s33 = sadd.s32 1, %s29
    $region7: #{tpu_custom_call.1} parent=1 // loop_footer_branch
      %28 = sbr.rel target = $region3
    $region8: #{tpu_custom_call.1} parent=1 // loop_exit
      _
    %2650 = vsyncpa [#allocation4], 1
    %s2651 = scalar_lea.sflag [#allocation4], 1
    %2652 = vsyncpa %s2651, 1

</llo_original>
